<compile_context>
chip_gen: v6e
topology: v6e:2x2x1
jax: 0.10.0
libtpu: 0.0.40
codegen_flags: <defaults>
</compile_context>

<pallas_src>
import functools
import math

import jax
import jax.numpy as jnp
from jax import lax
from jax.experimental import pallas as pl
from jax.experimental.pallas import tpu as pltpu

NEG_SLOPE = 0.01  # torch.nn.functional.leaky_relu default


def _leaky_relu(v):
    return jnp.where(v > 0, v, NEG_SLOPE * v)


def cen_ddrqn_kernel(x_ref, h0_ref,
                     w1_ref, b1_ref, w2_ref, b2_ref,
                     wih_ref, bih_ref, whh_ref, bhh_ref,
                     w3_ref, b3_ref, w4_ref, b4_ref,
                     q_ref, hout_ref,
                     gi_ref, hs_ref,
                     *, T, Bp, Hp):
    """Whole sequence in one invocation.

    x_ref:  (T*Bp, D)     time-major, batch padded to Bp (multiple of 8)
    gi_ref: (T*Bp, 3*Hp)  VMEM scratch for batched input-gate projection
    hs_ref: (T*Bp, Hp)    VMEM scratch for stacked per-step hidden states
    """
    # ---- batched (T*Bp rows) non-recurrent prologue: fc1, fc2, gi ----
    x = x_ref[...]
    a1 = _leaky_relu(
        jnp.dot(x, w1_ref[...], preferred_element_type=jnp.float32) + b1_ref[...])
    a2 = _leaky_relu(
        jnp.dot(a1, w2_ref[...], preferred_element_type=jnp.float32) + b2_ref[...])
    gi_ref[...] = (
        jnp.dot(a2, wih_ref[...], preferred_element_type=jnp.float32) + bih_ref[...])

    # ---- sequential GRU recurrence (only gh dot + gate math per step) ----
    whh = whh_ref[...]
    bhh = bhh_ref[...]
    h = h0_ref[...]                                    # (Bp, Hp) loop carry
    for t in range(T):                                 # static, fully unrolled
        r0 = t * Bp                                    # 8-aligned static offset
        gi = gi_ref[pl.ds(r0, Bp), :]                  # (Bp, 3*Hp)
        gh = jnp.dot(h, whh, preferred_element_type=jnp.float32) + bhh
        # PyTorch gate ordering: r, z, n — each block is a full 128-lane group.
        r = jax.nn.sigmoid(gi[:, 0:Hp] + gh[:, 0:Hp])
        z = jax.nn.sigmoid(gi[:, Hp:2 * Hp] + gh[:, Hp:2 * Hp])
        n = jnp.tanh(gi[:, 2 * Hp:3 * Hp] + r * gh[:, 2 * Hp:3 * Hp])
        h = (1.0 - z) * n + z * h
        hs_ref[pl.ds(r0, Bp), :] = h
    hout_ref[...] = h                                  # written once

    # ---- batched epilogue: fc3 + fc4 over all stacked hidden states ----
    hs = hs_ref[...]
    a3 = _leaky_relu(
        jnp.dot(hs, w3_ref[...], preferred_element_type=jnp.float32) + b3_ref[...])
    q_ref[...] = (
        jnp.dot(a3, w4_ref[...], preferred_element_type=jnp.float32) + b4_ref[...])


def cen_ddrqn_forward(x, params, h=None):
    """x: (B, T, input_dim), h: optional (1, B, H). Returns (q, h)."""
    B, T, D = x.shape
    MLP = params["w1"].shape[1]
    H = params["whh"].shape[0]
    O = params["w4"].shape[1]

    Bp = ((B + 7) // 8) * 8            # pad batch rows to sublane multiple
    Hp = ((H + 127) // 128) * 128      # pad each gate block to full lanes

    # --- re-lay-out GRU weights so each gate (r,z,n) lands on a 128-lane block
    def pad_gate_cols(w):
        r, z, n = w[:, :H], w[:, H:2 * H], w[:, 2 * H:3 * H]
        padc = lambda a: jnp.pad(a, ((0, 0), (0, Hp - H)))
        return jnp.concatenate([padc(r), padc(z), padc(n)], axis=1)

    wih = pad_gate_cols(params["wih"])                                # (MLP, 3*Hp)
    bih = pad_gate_cols(params["bih"])                                # (1, 3*Hp)
    whh = jnp.pad(pad_gate_cols(params["whh"]), ((0, Hp - H), (0, 0)))  # (Hp, 3*Hp)
    bhh = pad_gate_cols(params["bhh"])                                # (1, 3*Hp)
    w3 = jnp.pad(params["w3"], ((0, Hp - H), (0, 0)))                 # (Hp, MLP)

    if h is None:
        h0 = jnp.zeros((Bp, Hp), jnp.float32)
    else:
        h0 = jnp.zeros((Bp, Hp), jnp.float32).at[:B, :H].set(
            h[0].astype(jnp.float32))

    # Time-major, batch-padded, flattened to (T*Bp, D) for the batched matmuls.
    x_tm = jnp.transpose(x.astype(jnp.float32), (1, 0, 2))            # (T, B, D)
    x_tm = jnp.pad(x_tm, ((0, 0), (0, Bp - B), (0, 0)))               # (T, Bp, D)
    x_flat = x_tm.reshape(T * Bp, D)

    def full(shape):
        nd = len(shape)
        return pl.BlockSpec(shape, lambda i, _nd=nd: (0,) * _nd)

    in_specs = [
        full((T * Bp, D)), full((Bp, Hp)),
        full(params["w1"].shape), full(params["b1"].shape),
        full(params["w2"].shape), full(params["b2"].shape),
        full(wih.shape), full(bih.shape),
        full(whh.shape), full(bhh.shape),
        full(w3.shape), full(params["b3"].shape),
        full(params["w4"].shape), full(params["b4"].shape),
    ]
    out_specs = [full((T * Bp, O)), full((Bp, Hp))]
    out_shape = (jax.ShapeDtypeStruct((T * Bp, O), jnp.float32),
                 jax.ShapeDtypeStruct((Bp, Hp), jnp.float32))

    kernel = functools.partial(cen_ddrqn_kernel, T=T, Bp=Bp, Hp=Hp)

    q_flat, h_out = pl.pallas_call(
        kernel,
        out_shape=out_shape,
        grid_spec=pltpu.PrefetchScalarGridSpec(
            num_scalar_prefetch=0,
            grid=(1,),
            in_specs=in_specs,
            out_specs=out_specs,
            scratch_shapes=[pltpu.VMEM((T * Bp, 3 * Hp), jnp.float32),
                            pltpu.VMEM((T * Bp, Hp), jnp.float32)],
        ),
        compiler_params=pltpu.CompilerParams(
            dimension_semantics=("arbitrary",)),
    )(x_flat, h0,
      params["w1"], params["b1"], params["w2"], params["b2"],
      wih, bih, whh, bhh,
      w3, params["b3"], params["w4"], params["b4"])

    q = q_flat.reshape(T, Bp, O)[:, :B, :]
    q = jnp.transpose(q, (1, 0, 2))                                   # (B, T, O)
    return q, h_out[:B, :H][None]                                     # (1, B, H)


# ---------------- deterministic parameter construction ----------------
def _xavier_uniform(key, fan_in, fan_out, gain):
    bound = gain * math.sqrt(6.0 / (fan_in + fan_out))
    return jax.random.uniform(key, (fan_in, fan_out), jnp.float32, -bound, bound)


def init_params(key, input_dim, output_dim, mlp=32, H=64):
    gain_lrelu = math.sqrt(2.0 / (1.0 + NEG_SLOPE ** 2))
    k1, k2, k3, k4, k5, k6, k7, k8 = jax.random.split(key, 8)
    kgru = 1.0 / math.sqrt(H)
    params = {
        # Linear layers stored as (in, out); xavier-uniform is symmetric in
        # fan_in/fan_out so this matches the PyTorch (out, in) init.
        "w1": _xavier_uniform(k1, input_dim, mlp, gain_lrelu),
        "b1": jnp.zeros((1, mlp), jnp.float32),
        "w2": _xavier_uniform(k2, mlp, mlp, gain_lrelu),
        "b2": jnp.zeros((1, mlp), jnp.float32),
        # GRU params (PyTorch default U(-1/sqrt(H), 1/sqrt(H)), gate order r,z,n)
        "wih": jax.random.uniform(k3, (mlp, 3 * H), jnp.float32, -kgru, kgru),
        "bih": jax.random.uniform(k4, (1, 3 * H), jnp.float32, -kgru, kgru),
        "whh": jax.random.uniform(k5, (H, 3 * H), jnp.float32, -kgru, kgru),
        "bhh": jax.random.uniform(k6, (1, 3 * H), jnp.float32, -kgru, kgru),
        "w3": _xavier_uniform(k7, H, mlp, gain_lrelu),
        "b3": jnp.zeros((1, mlp), jnp.float32),
        "w4": _xavier_uniform(k8, mlp, output_dim, 1.0),       # act_fn='linear'
        "b4": jnp.zeros((1, output_dim), jnp.float32),
    }
    return params


# ---------------- pure-JAX reference (for correctness check) ----------------
def ref_forward(x, params, h=None):
    B, T, D = x.shape
    H = params["whh"].shape[0]
    h0 = jnp.zeros((B, H), jnp.float32) if h is None else h[0]

    a1 = _leaky_relu(x @ params["w1"] + params["b1"][0])
    a2 = _leaky_relu(a1 @ params["w2"] + params["b2"][0])

    def step(h_prev, x_t):
        gi = x_t @ params["wih"] + params["bih"][0]
        gh = h_prev @ params["whh"] + params["bhh"][0]
        r = jax.nn.sigmoid(gi[:, 0:H] + gh[:, 0:H])
        z = jax.nn.sigmoid(gi[:, H:2 * H] + gh[:, H:2 * H])
        n = jnp.tanh(gi[:, 2 * H:3 * H] + r * gh[:, 2 * H:3 * H])
        h_new = (1.0 - z) * n + z * h_prev
        return h_new, h_new

    h_last, hs = lax.scan(step, h0, jnp.transpose(a2, (1, 0, 2)))
    hs = jnp.transpose(hs, (1, 0, 2))                          # (B, T, H)
    a3 = _leaky_relu(hs @ params["w3"] + params["b3"][0])
    q = a3 @ params["w4"] + params["b4"][0]
    return q, h_last[None]


if __name__ == "__main__":
    B, T, INPUT_DIM, OUTPUT_DIM = 8, 6, 24, 10
    MLP, H = 32, 64

    key = jax.random.PRNGKey(0)
    kx, kp = jax.random.split(key)
    x = jax.random.normal(kx, (B, T, INPUT_DIM), jnp.float32)
    params = init_params(kp, INPUT_DIM, OUTPUT_DIM, mlp=MLP, H=H)

    fwd = jax.jit(cen_ddrqn_forward)
    q, h = fwd(x, params)
    q = jax.block_until_ready(q)
    h = jax.block_until_ready(h)

    q_ref, h_ref = ref_forward(x, params, h=None)
    assert q.shape == (B, T, OUTPUT_DIM) and h.shape == (1, B, H)
    assert jnp.allclose(q, q_ref, atol=1e-3, rtol=1e-3)
    assert jnp.allclose(h, h_ref, atol=1e-3, rtol=1e-3)

    print("KERNEL_OK")
</pallas_src>

<mosaic_0001>
module attributes {stable_mosaic.version = 11 : i64} {
  func.func @cen_ddrqn_kernel(%arg0: i32, %arg1: memref<48x24xf32, #tpu.memory_space<vmem>>, %arg2: memref<8x128xf32, #tpu.memory_space<vmem>>, %arg3: memref<24x32xf32, #tpu.memory_space<vmem>>, %arg4: memref<1x32xf32, #tpu.memory_space<vmem>>, %arg5: memref<32x32xf32, #tpu.memory_space<vmem>>, %arg6: memref<1x32xf32, #tpu.memory_space<vmem>>, %arg7: memref<32x384xf32, #tpu.memory_space<vmem>>, %arg8: memref<1x384xf32, #tpu.memory_space<vmem>>, %arg9: memref<128x384xf32, #tpu.memory_space<vmem>>, %arg10: memref<1x384xf32, #tpu.memory_space<vmem>>, %arg11: memref<128x32xf32, #tpu.memory_space<vmem>>, %arg12: memref<1x32xf32, #tpu.memory_space<vmem>>, %arg13: memref<32x10xf32, #tpu.memory_space<vmem>>, %arg14: memref<1x10xf32, #tpu.memory_space<vmem>>, %arg15: memref<48x10xf32, #tpu.memory_space<vmem>>, %arg16: memref<8x128xf32, #tpu.memory_space<vmem>>, %arg17: memref<48x384xf32, #tpu.memory_space<vmem>>, %arg18: memref<48x128xf32, #tpu.memory_space<vmem>>) attributes {dimension_semantics = [#tpu.dimension_semantics<arbitrary>], iteration_bounds = array<i64: 1>, scalar_prefetch = 0 : i64, scratch_operands = 2 : i64, tpu.core_type = #tpu.core_type<tc>, window_params = [{pipeline_mode = #tpu.pipeline_mode<synchronous>, transform_indices = @transform_0, window_bounds = array<i64: 48, 24>}, {pipeline_mode = #tpu.pipeline_mode<synchronous>, transform_indices = @transform_1, window_bounds = array<i64: 8, 128>}, {pipeline_mode = #tpu.pipeline_mode<synchronous>, transform_indices = @transform_2, window_bounds = array<i64: 24, 32>}, {pipeline_mode = #tpu.pipeline_mode<synchronous>, transform_indices = @transform_3, window_bounds = array<i64: 1, 32>}, {pipeline_mode = #tpu.pipeline_mode<synchronous>, transform_indices = @transform_4, window_bounds = array<i64: 32, 32>}, {pipeline_mode = #tpu.pipeline_mode<synchronous>, transform_indices = @transform_5, window_bounds = array<i64: 1, 32>}, {pipeline_mode = #tpu.pipeline_mode<synchronous>, transform_indices = @transform_6, window_bounds = array<i64: 32, 384>}, {pipeline_mode = #tpu.pipeline_mode<synchronous>, transform_indices = @transform_7, window_bounds = array<i64: 1, 384>}, {pipeline_mode = #tpu.pipeline_mode<synchronous>, transform_indices = @transform_8, window_bounds = array<i64: 128, 384>}, {pipeline_mode = #tpu.pipeline_mode<synchronous>, transform_indices = @transform_9, window_bounds = array<i64: 1, 384>}, {pipeline_mode = #tpu.pipeline_mode<synchronous>, transform_indices = @transform_10, window_bounds = array<i64: 128, 32>}, {pipeline_mode = #tpu.pipeline_mode<synchronous>, transform_indices = @transform_11, window_bounds = array<i64: 1, 32>}, {pipeline_mode = #tpu.pipeline_mode<synchronous>, transform_indices = @transform_12, window_bounds = array<i64: 32, 10>}, {pipeline_mode = #tpu.pipeline_mode<synchronous>, transform_indices = @transform_13, window_bounds = array<i64: 1, 10>}, {pipeline_mode = #tpu.pipeline_mode<synchronous>, transform_indices = @transform_14, window_bounds = array<i64: 48, 10>}, {pipeline_mode = #tpu.pipeline_mode<synchronous>, transform_indices = @transform_15, window_bounds = array<i64: 8, 128>}]} {
    %c0 = arith.constant 0 : index
    %c0_0 = arith.constant 0 : index
    %0 = vector.load %arg1[%c0, %c0_0] : memref<48x24xf32, #tpu.memory_space<vmem>>, vector<48x24xf32>
    %c0_1 = arith.constant 0 : index
    %c0_2 = arith.constant 0 : index
    %1 = vector.load %arg3[%c0_1, %c0_2] : memref<24x32xf32, #tpu.memory_space<vmem>>, vector<24x32xf32>
    %cst = arith.constant dense<0.000000e+00> : vector<48x32xf32>
    %2 = tpu.matmul %0, %1, %cst {dimension_numbers = #tpu.dot_dimension_numbers<[1], [0], [0], [1], [0, 0, 1, 1], [], []>} : vector<48x24xf32>, vector<24x32xf32>, vector<48x32xf32> -> vector<48x32xf32>
    %c0_3 = arith.constant 0 : index
    %c0_4 = arith.constant 0 : index
    %3 = vector.load %arg4[%c0_3, %c0_4] : memref<1x32xf32, #tpu.memory_space<vmem>>, vector<1x32xf32>
    %4 = vector.broadcast %3 : vector<1x32xf32> to vector<48x32xf32>
    %5 = arith.addf %2, %4 : vector<48x32xf32>
    %cst_5 = arith.constant 0.000000e+00 : f32
    %6 = vector.broadcast %cst_5 : f32 to vector<48x32xf32>
    %7 = arith.cmpf ogt, %5, %6 : vector<48x32xf32>
    %cst_6 = arith.constant 0.00999999977 : f32
    %8 = vector.broadcast %cst_6 : f32 to vector<48x32xf32>
    %9 = arith.mulf %8, %5 : vector<48x32xf32>
    %10 = arith.select %7, %5, %9 : vector<48x32xi1>, vector<48x32xf32>
    %c0_7 = arith.constant 0 : index
    %c0_8 = arith.constant 0 : index
    %11 = vector.load %arg5[%c0_7, %c0_8] : memref<32x32xf32, #tpu.memory_space<vmem>>, vector<32x32xf32>
    %cst_9 = arith.constant dense<0.000000e+00> : vector<48x32xf32>
    %12 = tpu.matmul %10, %11, %cst_9 {dimension_numbers = #tpu.dot_dimension_numbers<[1], [0], [0], [1], [0, 0, 1, 1], [], []>} : vector<48x32xf32>, vector<32x32xf32>, vector<48x32xf32> -> vector<48x32xf32>
    %c0_10 = arith.constant 0 : index
    %c0_11 = arith.constant 0 : index
    %13 = vector.load %arg6[%c0_10, %c0_11] : memref<1x32xf32, #tpu.memory_space<vmem>>, vector<1x32xf32>
    %14 = vector.broadcast %13 : vector<1x32xf32> to vector<48x32xf32>
    %15 = arith.addf %12, %14 : vector<48x32xf32>
    %cst_12 = arith.constant 0.000000e+00 : f32
    %16 = vector.broadcast %cst_12 : f32 to vector<48x32xf32>
    %17 = arith.cmpf ogt, %15, %16 : vector<48x32xf32>
    %cst_13 = arith.constant 0.00999999977 : f32
    %18 = vector.broadcast %cst_13 : f32 to vector<48x32xf32>
    %19 = arith.mulf %18, %15 : vector<48x32xf32>
    %20 = arith.select %17, %15, %19 : vector<48x32xi1>, vector<48x32xf32>
    %c0_14 = arith.constant 0 : index
    %c0_15 = arith.constant 0 : index
    %21 = vector.load %arg7[%c0_14, %c0_15] : memref<32x384xf32, #tpu.memory_space<vmem>>, vector<32x384xf32>
    %cst_16 = arith.constant dense<0.000000e+00> : vector<48x384xf32>
    %22 = tpu.matmul %20, %21, %cst_16 {dimension_numbers = #tpu.dot_dimension_numbers<[1], [0], [0], [1], [0, 0, 1, 1], [], []>} : vector<48x32xf32>, vector<32x384xf32>, vector<48x384xf32> -> vector<48x384xf32>
    %c0_17 = arith.constant 0 : index
    %c0_18 = arith.constant 0 : index
    %23 = vector.load %arg8[%c0_17, %c0_18] : memref<1x384xf32, #tpu.memory_space<vmem>>, vector<1x384xf32>
    %24 = vector.broadcast %23 : vector<1x384xf32> to vector<48x384xf32>
    %25 = arith.addf %22, %24 : vector<48x384xf32>
    %c0_19 = arith.constant 0 : index
    %c0_20 = arith.constant 0 : index
    %26 = vector.load %arg17[%c0_19, %c0_20] : memref<48x384xf32, #tpu.memory_space<vmem>>, vector<48x384xf32>
    tpu.vector_store %arg17[%c0_19, %c0_20], %25 {strides = array<i32>} : memref<48x384xf32, #tpu.memory_space<vmem>>, vector<48x384xf32>,
    %c0_21 = arith.constant 0 : index
    %c0_22 = arith.constant 0 : index
    %27 = vector.load %arg9[%c0_21, %c0_22] : memref<128x384xf32, #tpu.memory_space<vmem>>, vector<128x384xf32>
    %c0_23 = arith.constant 0 : index
    %c0_24 = arith.constant 0 : index
    %28 = vector.load %arg10[%c0_23, %c0_24] : memref<1x384xf32, #tpu.memory_space<vmem>>, vector<1x384xf32>
    %c0_25 = arith.constant 0 : index
    %c0_26 = arith.constant 0 : index
    %29 = vector.load %arg2[%c0_25, %c0_26] : memref<8x128xf32, #tpu.memory_space<vmem>>, vector<8x128xf32>
    %c0_27 = arith.constant 0 : index
    %c0_28 = arith.constant 0 : index
    %30 = vector.load %arg17[%c0_27, %c0_28] : memref<48x384xf32, #tpu.memory_space<vmem>>, vector<8x384xf32>
    %cst_29 = arith.constant dense<0.000000e+00> : vector<8x384xf32>
    %31 = tpu.matmul %29, %27, %cst_29 {dimension_numbers = #tpu.dot_dimension_numbers<[1], [0], [0], [1], [0, 0, 1, 1], [], []>} : vector<8x128xf32>, vector<128x384xf32>, vector<8x384xf32> -> vector<8x384xf32>
    %32 = vector.broadcast %28 : vector<1x384xf32> to vector<8x384xf32>
    %33 = arith.addf %31, %32 : vector<8x384xf32>
    %34 = vector.extract_strided_slice %30 {offsets = [0, 0], sizes = [8, 128], strides = [1, 1]} : vector<8x384xf32> to vector<8x128xf32>
    %35 = vector.extract_strided_slice %33 {offsets = [0, 0], sizes = [8, 128], strides = [1, 1]} : vector<8x384xf32> to vector<8x128xf32>
    %36 = arith.addf %34, %35 : vector<8x128xf32>
    %37 = arith.negf %36 : vector<8x128xf32>
    %38 = math.exp %37 : vector<8x128xf32>
    %cst_30 = arith.constant 1.000000e+00 : f32
    %39 = vector.broadcast %cst_30 : f32 to vector<8x128xf32>
    %40 = arith.addf %39, %38 : vector<8x128xf32>
    %41 = arith.divf %39, %40 : vector<8x128xf32>
    %42 = vector.extract_strided_slice %30 {offsets = [0, 128], sizes = [8, 128], strides = [1, 1]} : vector<8x384xf32> to vector<8x128xf32>
    %43 = vector.extract_strided_slice %33 {offsets = [0, 128], sizes = [8, 128], strides = [1, 1]} : vector<8x384xf32> to vector<8x128xf32>
    %44 = arith.addf %42, %43 : vector<8x128xf32>
    %45 = arith.negf %44 : vector<8x128xf32>
    %46 = math.exp %45 : vector<8x128xf32>
    %cst_31 = arith.constant 1.000000e+00 : f32
    %47 = vector.broadcast %cst_31 : f32 to vector<8x128xf32>
    %48 = arith.addf %47, %46 : vector<8x128xf32>
    %49 = arith.divf %47, %48 : vector<8x128xf32>
    %50 = vector.extract_strided_slice %30 {offsets = [0, 256], sizes = [8, 128], strides = [1, 1]} : vector<8x384xf32> to vector<8x128xf32>
    %51 = vector.extract_strided_slice %33 {offsets = [0, 256], sizes = [8, 128], strides = [1, 1]} : vector<8x384xf32> to vector<8x128xf32>
    %52 = arith.mulf %41, %51 : vector<8x128xf32>
    %53 = arith.addf %50, %52 : vector<8x128xf32>
    %54 = math.tanh %53 : vector<8x128xf32>
    %cst_32 = arith.constant 1.000000e+00 : f32
    %55 = vector.broadcast %cst_32 : f32 to vector<8x128xf32>
    %56 = arith.subf %55, %49 : vector<8x128xf32>
    %57 = arith.mulf %56, %54 : vector<8x128xf32>
    %58 = arith.mulf %49, %29 : vector<8x128xf32>
    %59 = arith.addf %57, %58 : vector<8x128xf32>
    %c0_33 = arith.constant 0 : index
    %c0_34 = arith.constant 0 : index
    %60 = vector.load %arg18[%c0_33, %c0_34] : memref<48x128xf32, #tpu.memory_space<vmem>>, vector<8x128xf32>
    tpu.vector_store %arg18[%c0_33, %c0_34], %59 {strides = array<i32>} : memref<48x128xf32, #tpu.memory_space<vmem>>, vector<8x128xf32>,
    %c8 = arith.constant 8 : index
    %c0_35 = arith.constant 0 : index
    %61 = vector.load %arg17[%c8, %c0_35] : memref<48x384xf32, #tpu.memory_space<vmem>>, vector<8x384xf32>
    %cst_36 = arith.constant dense<0.000000e+00> : vector<8x384xf32>
    %62 = tpu.matmul %59, %27, %cst_36 {dimension_numbers = #tpu.dot_dimension_numbers<[1], [0], [0], [1], [0, 0, 1, 1], [], []>} : vector<8x128xf32>, vector<128x384xf32>, vector<8x384xf32> -> vector<8x384xf32>
    %63 = vector.broadcast %28 : vector<1x384xf32> to vector<8x384xf32>
    %64 = arith.addf %62, %63 : vector<8x384xf32>
    %65 = vector.extract_strided_slice %61 {offsets = [0, 0], sizes = [8, 128], strides = [1, 1]} : vector<8x384xf32> to vector<8x128xf32>
    %66 = vector.extract_strided_slice %64 {offsets = [0, 0], sizes = [8, 128], strides = [1, 1]} : vector<8x384xf32> to vector<8x128xf32>
    %67 = arith.addf %65, %66 : vector<8x128xf32>
    %68 = arith.negf %67 : vector<8x128xf32>
    %69 = math.exp %68 : vector<8x128xf32>
    %cst_37 = arith.constant 1.000000e+00 : f32
    %70 = vector.broadcast %cst_37 : f32 to vector<8x128xf32>
    %71 = arith.addf %70, %69 : vector<8x128xf32>
    %72 = arith.divf %70, %71 : vector<8x128xf32>
    %73 = vector.extract_strided_slice %61 {offsets = [0, 128], sizes = [8, 128], strides = [1, 1]} : vector<8x384xf32> to vector<8x128xf32>
    %74 = vector.extract_strided_slice %64 {offsets = [0, 128], sizes = [8, 128], strides = [1, 1]} : vector<8x384xf32> to vector<8x128xf32>
    %75 = arith.addf %73, %74 : vector<8x128xf32>
    %76 = arith.negf %75 : vector<8x128xf32>
    %77 = math.exp %76 : vector<8x128xf32>
    %cst_38 = arith.constant 1.000000e+00 : f32
    %78 = vector.broadcast %cst_38 : f32 to vector<8x128xf32>
    %79 = arith.addf %78, %77 : vector<8x128xf32>
    %80 = arith.divf %78, %79 : vector<8x128xf32>
    %81 = vector.extract_strided_slice %61 {offsets = [0, 256], sizes = [8, 128], strides = [1, 1]} : vector<8x384xf32> to vector<8x128xf32>
    %82 = vector.extract_strided_slice %64 {offsets = [0, 256], sizes = [8, 128], strides = [1, 1]} : vector<8x384xf32> to vector<8x128xf32>
    %83 = arith.mulf %72, %82 : vector<8x128xf32>
    %84 = arith.addf %81, %83 : vector<8x128xf32>
    %85 = math.tanh %84 : vector<8x128xf32>
    %cst_39 = arith.constant 1.000000e+00 : f32
    %86 = vector.broadcast %cst_39 : f32 to vector<8x128xf32>
    %87 = arith.subf %86, %80 : vector<8x128xf32>
    %88 = arith.mulf %87, %85 : vector<8x128xf32>
    %89 = arith.mulf %80, %59 : vector<8x128xf32>
    %90 = arith.addf %88, %89 : vector<8x128xf32>
    %c8_40 = arith.constant 8 : index
    %c0_41 = arith.constant 0 : index
    %91 = vector.load %arg18[%c8_40, %c0_41] : memref<48x128xf32, #tpu.memory_space<vmem>>, vector<8x128xf32>
    tpu.vector_store %arg18[%c8_40, %c0_41], %90 {strides = array<i32>} : memref<48x128xf32, #tpu.memory_space<vmem>>, vector<8x128xf32>,
    %c16 = arith.constant 16 : index
    %c0_42 = arith.constant 0 : index
    %92 = vector.load %arg17[%c16, %c0_42] : memref<48x384xf32, #tpu.memory_space<vmem>>, vector<8x384xf32>
    %cst_43 = arith.constant dense<0.000000e+00> : vector<8x384xf32>
    %93 = tpu.matmul %90, %27, %cst_43 {dimension_numbers = #tpu.dot_dimension_numbers<[1], [0], [0], [1], [0, 0, 1, 1], [], []>} : vector<8x128xf32>, vector<128x384xf32>, vector<8x384xf32> -> vector<8x384xf32>
    %94 = vector.broadcast %28 : vector<1x384xf32> to vector<8x384xf32>
    %95 = arith.addf %93, %94 : vector<8x384xf32>
    %96 = vector.extract_strided_slice %92 {offsets = [0, 0], sizes = [8, 128], strides = [1, 1]} : vector<8x384xf32> to vector<8x128xf32>
    %97 = vector.extract_strided_slice %95 {offsets = [0, 0], sizes = [8, 128], strides = [1, 1]} : vector<8x384xf32> to vector<8x128xf32>
    %98 = arith.addf %96, %97 : vector<8x128xf32>
    %99 = arith.negf %98 : vector<8x128xf32>
    %100 = math.exp %99 : vector<8x128xf32>
    %cst_44 = arith.constant 1.000000e+00 : f32
    %101 = vector.broadcast %cst_44 : f32 to vector<8x128xf32>
    %102 = arith.addf %101, %100 : vector<8x128xf32>
    %103 = arith.divf %101, %102 : vector<8x128xf32>
    %104 = vector.extract_strided_slice %92 {offsets = [0, 128], sizes = [8, 128], strides = [1, 1]} : vector<8x384xf32> to vector<8x128xf32>
    %105 = vector.extract_strided_slice %95 {offsets = [0, 128], sizes = [8, 128], strides = [1, 1]} : vector<8x384xf32> to vector<8x128xf32>
    %106 = arith.addf %104, %105 : vector<8x128xf32>
    %107 = arith.negf %106 : vector<8x128xf32>
    %108 = math.exp %107 : vector<8x128xf32>
    %cst_45 = arith.constant 1.000000e+00 : f32
    %109 = vector.broadcast %cst_45 : f32 to vector<8x128xf32>
    %110 = arith.addf %109, %108 : vector<8x128xf32>
    %111 = arith.divf %109, %110 : vector<8x128xf32>
    %112 = vector.extract_strided_slice %92 {offsets = [0, 256], sizes = [8, 128], strides = [1, 1]} : vector<8x384xf32> to vector<8x128xf32>
    %113 = vector.extract_strided_slice %95 {offsets = [0, 256], sizes = [8, 128], strides = [1, 1]} : vector<8x384xf32> to vector<8x128xf32>
    %114 = arith.mulf %103, %113 : vector<8x128xf32>
    %115 = arith.addf %112, %114 : vector<8x128xf32>
    %116 = math.tanh %115 : vector<8x128xf32>
    %cst_46 = arith.constant 1.000000e+00 : f32
    %117 = vector.broadcast %cst_46 : f32 to vector<8x128xf32>
    %118 = arith.subf %117, %111 : vector<8x128xf32>
    %119 = arith.mulf %118, %116 : vector<8x128xf32>
    %120 = arith.mulf %111, %90 : vector<8x128xf32>
    %121 = arith.addf %119, %120 : vector<8x128xf32>
    %c16_47 = arith.constant 16 : index
    %c0_48 = arith.constant 0 : index
    %122 = vector.load %arg18[%c16_47, %c0_48] : memref<48x128xf32, #tpu.memory_space<vmem>>, vector<8x128xf32>
    tpu.vector_store %arg18[%c16_47, %c0_48], %121 {strides = array<i32>} : memref<48x128xf32, #tpu.memory_space<vmem>>, vector<8x128xf32>,
    %c24 = arith.constant 24 : index
    %c0_49 = arith.constant 0 : index
    %123 = vector.load %arg17[%c24, %c0_49] : memref<48x384xf32, #tpu.memory_space<vmem>>, vector<8x384xf32>
    %cst_50 = arith.constant dense<0.000000e+00> : vector<8x384xf32>
    %124 = tpu.matmul %121, %27, %cst_50 {dimension_numbers = #tpu.dot_dimension_numbers<[1], [0], [0], [1], [0, 0, 1, 1], [], []>} : vector<8x128xf32>, vector<128x384xf32>, vector<8x384xf32> -> vector<8x384xf32>
    %125 = vector.broadcast %28 : vector<1x384xf32> to vector<8x384xf32>
    %126 = arith.addf %124, %125 : vector<8x384xf32>
    %127 = vector.extract_strided_slice %123 {offsets = [0, 0], sizes = [8, 128], strides = [1, 1]} : vector<8x384xf32> to vector<8x128xf32>
    %128 = vector.extract_strided_slice %126 {offsets = [0, 0], sizes = [8, 128], strides = [1, 1]} : vector<8x384xf32> to vector<8x128xf32>
    %129 = arith.addf %127, %128 : vector<8x128xf32>
    %130 = arith.negf %129 : vector<8x128xf32>
    %131 = math.exp %130 : vector<8x128xf32>
    %cst_51 = arith.constant 1.000000e+00 : f32
    %132 = vector.broadcast %cst_51 : f32 to vector<8x128xf32>
    %133 = arith.addf %132, %131 : vector<8x128xf32>
    %134 = arith.divf %132, %133 : vector<8x128xf32>
    %135 = vector.extract_strided_slice %123 {offsets = [0, 128], sizes = [8, 128], strides = [1, 1]} : vector<8x384xf32> to vector<8x128xf32>
    %136 = vector.extract_strided_slice %126 {offsets = [0, 128], sizes = [8, 128], strides = [1, 1]} : vector<8x384xf32> to vector<8x128xf32>
    %137 = arith.addf %135, %136 : vector<8x128xf32>
    %138 = arith.negf %137 : vector<8x128xf32>
    %139 = math.exp %138 : vector<8x128xf32>
    %cst_52 = arith.constant 1.000000e+00 : f32
    %140 = vector.broadcast %cst_52 : f32 to vector<8x128xf32>
    %141 = arith.addf %140, %139 : vector<8x128xf32>
    %142 = arith.divf %140, %141 : vector<8x128xf32>
    %143 = vector.extract_strided_slice %123 {offsets = [0, 256], sizes = [8, 128], strides = [1, 1]} : vector<8x384xf32> to vector<8x128xf32>
    %144 = vector.extract_strided_slice %126 {offsets = [0, 256], sizes = [8, 128], strides = [1, 1]} : vector<8x384xf32> to vector<8x128xf32>
    %145 = arith.mulf %134, %144 : vector<8x128xf32>
    %146 = arith.addf %143, %145 : vector<8x128xf32>
    %147 = math.tanh %146 : vector<8x128xf32>
    %cst_53 = arith.constant 1.000000e+00 : f32
    %148 = vector.broadcast %cst_53 : f32 to vector<8x128xf32>
    %149 = arith.subf %148, %142 : vector<8x128xf32>
    %150 = arith.mulf %149, %147 : vector<8x128xf32>
    %151 = arith.mulf %142, %121 : vector<8x128xf32>
    %152 = arith.addf %150, %151 : vector<8x128xf32>
    %c24_54 = arith.constant 24 : index
    %c0_55 = arith.constant 0 : index
    %153 = vector.load %arg18[%c24_54, %c0_55] : memref<48x128xf32, #tpu.memory_space<vmem>>, vector<8x128xf32>
    tpu.vector_store %arg18[%c24_54, %c0_55], %152 {strides = array<i32>} : memref<48x128xf32, #tpu.memory_space<vmem>>, vector<8x128xf32>,
    %c32 = arith.constant 32 : index
    %c0_56 = arith.constant 0 : index
    %154 = vector.load %arg17[%c32, %c0_56] : memref<48x384xf32, #tpu.memory_space<vmem>>, vector<8x384xf32>
    %cst_57 = arith.constant dense<0.000000e+00> : vector<8x384xf32>
    %155 = tpu.matmul %152, %27, %cst_57 {dimension_numbers = #tpu.dot_dimension_numbers<[1], [0], [0], [1], [0, 0, 1, 1], [], []>} : vector<8x128xf32>, vector<128x384xf32>, vector<8x384xf32> -> vector<8x384xf32>
    %156 = vector.broadcast %28 : vector<1x384xf32> to vector<8x384xf32>
    %157 = arith.addf %155, %156 : vector<8x384xf32>
    %158 = vector.extract_strided_slice %154 {offsets = [0, 0], sizes = [8, 128], strides = [1, 1]} : vector<8x384xf32> to vector<8x128xf32>
    %159 = vector.extract_strided_slice %157 {offsets = [0, 0], sizes = [8, 128], strides = [1, 1]} : vector<8x384xf32> to vector<8x128xf32>
    %160 = arith.addf %158, %159 : vector<8x128xf32>
    %161 = arith.negf %160 : vector<8x128xf32>
    %162 = math.exp %161 : vector<8x128xf32>
    %cst_58 = arith.constant 1.000000e+00 : f32
    %163 = vector.broadcast %cst_58 : f32 to vector<8x128xf32>
    %164 = arith.addf %163, %162 : vector<8x128xf32>
    %165 = arith.divf %163, %164 : vector<8x128xf32>
    %166 = vector.extract_strided_slice %154 {offsets = [0, 128], sizes = [8, 128], strides = [1, 1]} : vector<8x384xf32> to vector<8x128xf32>
    %167 = vector.extract_strided_slice %157 {offsets = [0, 128], sizes = [8, 128], strides = [1, 1]} : vector<8x384xf32> to vector<8x128xf32>
    %168 = arith.addf %166, %167 : vector<8x128xf32>
    %169 = arith.negf %168 : vector<8x128xf32>
    %170 = math.exp %169 : vector<8x128xf32>
    %cst_59 = arith.constant 1.000000e+00 : f32
    %171 = vector.broadcast %cst_59 : f32 to vector<8x128xf32>
    %172 = arith.addf %171, %170 : vector<8x128xf32>
    %173 = arith.divf %171, %172 : vector<8x128xf32>
    %174 = vector.extract_strided_slice %154 {offsets = [0, 256], sizes = [8, 128], strides = [1, 1]} : vector<8x384xf32> to vector<8x128xf32>
    %175 = vector.extract_strided_slice %157 {offsets = [0, 256], sizes = [8, 128], strides = [1, 1]} : vector<8x384xf32> to vector<8x128xf32>
    %176 = arith.mulf %165, %175 : vector<8x128xf32>
    %177 = arith.addf %174, %176 : vector<8x128xf32>
    %178 = math.tanh %177 : vector<8x128xf32>
    %cst_60 = arith.constant 1.000000e+00 : f32
    %179 = vector.broadcast %cst_60 : f32 to vector<8x128xf32>
    %180 = arith.subf %179, %173 : vector<8x128xf32>
    %181 = arith.mulf %180, %178 : vector<8x128xf32>
    %182 = arith.mulf %173, %152 : vector<8x128xf32>
    %183 = arith.addf %181, %182 : vector<8x128xf32>
    %c32_61 = arith.constant 32 : index
    %c0_62 = arith.constant 0 : index
    %184 = vector.load %arg18[%c32_61, %c0_62] : memref<48x128xf32, #tpu.memory_space<vmem>>, vector<8x128xf32>
    tpu.vector_store %arg18[%c32_61, %c0_62], %183 {strides = array<i32>} : memref<48x128xf32, #tpu.memory_space<vmem>>, vector<8x128xf32>,
    %c40 = arith.constant 40 : index
    %c0_63 = arith.constant 0 : index
    %185 = vector.load %arg17[%c40, %c0_63] : memref<48x384xf32, #tpu.memory_space<vmem>>, vector<8x384xf32>
    %cst_64 = arith.constant dense<0.000000e+00> : vector<8x384xf32>
    %186 = tpu.matmul %183, %27, %cst_64 {dimension_numbers = #tpu.dot_dimension_numbers<[1], [0], [0], [1], [0, 0, 1, 1], [], []>} : vector<8x128xf32>, vector<128x384xf32>, vector<8x384xf32> -> vector<8x384xf32>
    %187 = vector.broadcast %28 : vector<1x384xf32> to vector<8x384xf32>
    %188 = arith.addf %186, %187 : vector<8x384xf32>
    %189 = vector.extract_strided_slice %185 {offsets = [0, 0], sizes = [8, 128], strides = [1, 1]} : vector<8x384xf32> to vector<8x128xf32>
    %190 = vector.extract_strided_slice %188 {offsets = [0, 0], sizes = [8, 128], strides = [1, 1]} : vector<8x384xf32> to vector<8x128xf32>
    %191 = arith.addf %189, %190 : vector<8x128xf32>
    %192 = arith.negf %191 : vector<8x128xf32>
    %193 = math.exp %192 : vector<8x128xf32>
    %cst_65 = arith.constant 1.000000e+00 : f32
    %194 = vector.broadcast %cst_65 : f32 to vector<8x128xf32>
    %195 = arith.addf %194, %193 : vector<8x128xf32>
    %196 = arith.divf %194, %195 : vector<8x128xf32>
    %197 = vector.extract_strided_slice %185 {offsets = [0, 128], sizes = [8, 128], strides = [1, 1]} : vector<8x384xf32> to vector<8x128xf32>
    %198 = vector.extract_strided_slice %188 {offsets = [0, 128], sizes = [8, 128], strides = [1, 1]} : vector<8x384xf32> to vector<8x128xf32>
    %199 = arith.addf %197, %198 : vector<8x128xf32>
    %200 = arith.negf %199 : vector<8x128xf32>
    %201 = math.exp %200 : vector<8x128xf32>
    %cst_66 = arith.constant 1.000000e+00 : f32
    %202 = vector.broadcast %cst_66 : f32 to vector<8x128xf32>
    %203 = arith.addf %202, %201 : vector<8x128xf32>
    %204 = arith.divf %202, %203 : vector<8x128xf32>
    %205 = vector.extract_strided_slice %185 {offsets = [0, 256], sizes = [8, 128], strides = [1, 1]} : vector<8x384xf32> to vector<8x128xf32>
    %206 = vector.extract_strided_slice %188 {offsets = [0, 256], sizes = [8, 128], strides = [1, 1]} : vector<8x384xf32> to vector<8x128xf32>
    %207 = arith.mulf %196, %206 : vector<8x128xf32>
    %208 = arith.addf %205, %207 : vector<8x128xf32>
    %209 = math.tanh %208 : vector<8x128xf32>
    %cst_67 = arith.constant 1.000000e+00 : f32
    %210 = vector.broadcast %cst_67 : f32 to vector<8x128xf32>
    %211 = arith.subf %210, %204 : vector<8x128xf32>
    %212 = arith.mulf %211, %209 : vector<8x128xf32>
    %213 = arith.mulf %204, %183 : vector<8x128xf32>
    %214 = arith.addf %212, %213 : vector<8x128xf32>
    %c40_68 = arith.constant 40 : index
    %c0_69 = arith.constant 0 : index
    %215 = vector.load %arg18[%c40_68, %c0_69] : memref<48x128xf32, #tpu.memory_space<vmem>>, vector<8x128xf32>
    tpu.vector_store %arg18[%c40_68, %c0_69], %214 {strides = array<i32>} : memref<48x128xf32, #tpu.memory_space<vmem>>, vector<8x128xf32>,
    %c0_70 = arith.constant 0 : index
    %c0_71 = arith.constant 0 : index
    %216 = vector.load %arg16[%c0_70, %c0_71] : memref<8x128xf32, #tpu.memory_space<vmem>>, vector<8x128xf32>
    tpu.vector_store %arg16[%c0_70, %c0_71], %214 {strides = array<i32>} : memref<8x128xf32, #tpu.memory_space<vmem>>, vector<8x128xf32>,
    %c0_72 = arith.constant 0 : index
    %c0_73 = arith.constant 0 : index
    %217 = vector.load %arg18[%c0_72, %c0_73] : memref<48x128xf32, #tpu.memory_space<vmem>>, vector<48x128xf32>
    %c0_74 = arith.constant 0 : index
    %c0_75 = arith.constant 0 : index
    %218 = vector.load %arg11[%c0_74, %c0_75] : memref<128x32xf32, #tpu.memory_space<vmem>>, vector<128x32xf32>
    %cst_76 = arith.constant dense<0.000000e+00> : vector<48x32xf32>
    %219 = tpu.matmul %217, %218, %cst_76 {dimension_numbers = #tpu.dot_dimension_numbers<[1], [0], [0], [1], [0, 0, 1, 1], [], []>} : vector<48x128xf32>, vector<128x32xf32>, vector<48x32xf32> -> vector<48x32xf32>
    %c0_77 = arith.constant 0 : index
    %c0_78 = arith.constant 0 : index
    %220 = vector.load %arg12[%c0_77, %c0_78] : memref<1x32xf32, #tpu.memory_space<vmem>>, vector<1x32xf32>
    %221 = vector.broadcast %220 : vector<1x32xf32> to vector<48x32xf32>
    %222 = arith.addf %219, %221 : vector<48x32xf32>
    %cst_79 = arith.constant 0.000000e+00 : f32
    %223 = vector.broadcast %cst_79 : f32 to vector<48x32xf32>
    %224 = arith.cmpf ogt, %222, %223 : vector<48x32xf32>
    %cst_80 = arith.constant 0.00999999977 : f32
    %225 = vector.broadcast %cst_80 : f32 to vector<48x32xf32>
    %226 = arith.mulf %225, %222 : vector<48x32xf32>
    %227 = arith.select %224, %222, %226 : vector<48x32xi1>, vector<48x32xf32>
    %c0_81 = arith.constant 0 : index
    %c0_82 = arith.constant 0 : index
    %228 = vector.load %arg13[%c0_81, %c0_82] : memref<32x10xf32, #tpu.memory_space<vmem>>, vector<32x10xf32>
    %cst_83 = arith.constant dense<0.000000e+00> : vector<48x10xf32>
    %229 = tpu.matmul %227, %228, %cst_83 {dimension_numbers = #tpu.dot_dimension_numbers<[1], [0], [0], [1], [0, 0, 1, 1], [], []>} : vector<48x32xf32>, vector<32x10xf32>, vector<48x10xf32> -> vector<48x10xf32>
    %c0_84 = arith.constant 0 : index
    %c0_85 = arith.constant 0 : index
    %230 = vector.load %arg14[%c0_84, %c0_85] : memref<1x10xf32, #tpu.memory_space<vmem>>, vector<1x10xf32>
    %231 = vector.broadcast %230 : vector<1x10xf32> to vector<48x10xf32>
    %232 = arith.addf %229, %231 : vector<48x10xf32>
    %c0_86 = arith.constant 0 : index
    %c0_87 = arith.constant 0 : index
    %233 = vector.load %arg15[%c0_86, %c0_87] : memref<48x10xf32, #tpu.memory_space<vmem>>, vector<48x10xf32>
    tpu.vector_store %arg15[%c0_86, %c0_87], %232 {strides = array<i32>} : memref<48x10xf32, #tpu.memory_space<vmem>>, vector<48x10xf32>,
    return
  }
  func.func @transform_0(%arg0: i32) -> (i32, i32) {
    %c0_i32 = arith.constant 0 : i32
    %c0_i32_0 = arith.constant 0 : i32
    %c0_i32_1 = arith.constant 0 : i32
    return %c0_i32, %c0_i32_0 : i32, i32
  }
  func.func @transform_1(%arg0: i32) -> (i32, i32) {
    %c0_i32 = arith.constant 0 : i32
    %c0_i32_0 = arith.constant 0 : i32
    %c0_i32_1 = arith.constant 0 : i32
    return %c0_i32, %c0_i32_0 : i32, i32
  }
  func.func @transform_2(%arg0: i32) -> (i32, i32) {
    %c0_i32 = arith.constant 0 : i32
    %c0_i32_0 = arith.constant 0 : i32
    %c0_i32_1 = arith.constant 0 : i32
    return %c0_i32, %c0_i32_0 : i32, i32
  }
  func.func @transform_3(%arg0: i32) -> (i32, i32) {
    %c0_i32 = arith.constant 0 : i32
    %c0_i32_0 = arith.constant 0 : i32
    %c0_i32_1 = arith.constant 0 : i32
    return %c0_i32, %c0_i32_0 : i32, i32
  }
  func.func @transform_4(%arg0: i32) -> (i32, i32) {
    %c0_i32 = arith.constant 0 : i32
    %c0_i32_0 = arith.constant 0 : i32
    %c0_i32_1 = arith.constant 0 : i32
    return %c0_i32, %c0_i32_0 : i32, i32
  }
  func.func @transform_5(%arg0: i32) -> (i32, i32) {
    %c0_i32 = arith.constant 0 : i32
    %c0_i32_0 = arith.constant 0 : i32
    %c0_i32_1 = arith.constant 0 : i32
    return %c0_i32, %c0_i32_0 : i32, i32
  }
  func.func @transform_6(%arg0: i32) -> (i32, i32) {
    %c0_i32 = arith.constant 0 : i32
    %c0_i32_0 = arith.constant 0 : i32
    %c0_i32_1 = arith.constant 0 : i32
    return %c0_i32, %c0_i32_0 : i32, i32
  }
  func.func @transform_7(%arg0: i32) -> (i32, i32) {
    %c0_i32 = arith.constant 0 : i32
    %c0_i32_0 = arith.constant 0 : i32
    %c0_i32_1 = arith.constant 0 : i32
    return %c0_i32, %c0_i32_0 : i32, i32
  }
  func.func @transform_8(%arg0: i32) -> (i32, i32) {
    %c0_i32 = arith.constant 0 : i32
    %c0_i32_0 = arith.constant 0 : i32
    %c0_i32_1 = arith.constant 0 : i32
    return %c0_i32, %c0_i32_0 : i32, i32
  }
  func.func @transform_9(%arg0: i32) -> (i32, i32) {
    %c0_i32 = arith.constant 0 : i32
    %c0_i32_0 = arith.constant 0 : i32
    %c0_i32_1 = arith.constant 0 : i32
    return %c0_i32, %c0_i32_0 : i32, i32
  }
  func.func @transform_10(%arg0: i32) -> (i32, i32) {
    %c0_i32 = arith.constant 0 : i32
    %c0_i32_0 = arith.constant 0 : i32
    %c0_i32_1 = arith.constant 0 : i32
    return %c0_i32, %c0_i32_0 : i32, i32
  }
  func.func @transform_11(%arg0: i32) -> (i32, i32) {
    %c0_i32 = arith.constant 0 : i32
    %c0_i32_0 = arith.constant 0 : i32
    %c0_i32_1 = arith.constant 0 : i32
    return %c0_i32, %c0_i32_0 : i32, i32
  }
  func.func @transform_12(%arg0: i32) -> (i32, i32) {
    %c0_i32 = arith.constant 0 : i32
    %c0_i32_0 = arith.constant 0 : i32
    %c0_i32_1 = arith.constant 0 : i32
    return %c0_i32, %c0_i32_0 : i32, i32
  }
  func.func @transform_13(%arg0: i32) -> (i32, i32) {
    %c0_i32 = arith.constant 0 : i32
    %c0_i32_0 = arith.constant 0 : i32
    %c0_i32_1 = arith.constant 0 : i32
    return %c0_i32, %c0_i32_0 : i32, i32
  }
  func.func @transform_14(%arg0: i32) -> (i32, i32) {
    %c0_i32 = arith.constant 0 : i32
    %c0_i32_0 = arith.constant 0 : i32
    %c0_i32_1 = arith.constant 0 : i32
    return %c0_i32, %c0_i32_0 : i32, i32
  }
  func.func @transform_15(%arg0: i32) -> (i32, i32) {
    %c0_i32 = arith.constant 0 : i32
    %c0_i32_0 = arith.constant 0 : i32
    %c0_i32_1 = arith.constant 0 : i32
    return %c0_i32, %c0_i32_0 : i32, i32
  }
}

</mosaic_0001>

<llo_original>
// kernel: cen_ddrqn_forward.1
$region0: #{cen_ddrqn_forward.1}
  #allocation0 [shape = 'u32[]', space=smem, size = 0x4, offset = 0x4, fixed_abs, tag = 'smem constant byte address 0x4 - core index']
  #allocation1 [shape = 'u32[144,128]{1,0:T(1,128)}', space=vmem, size = 0x12000, scoped, tag = 'internal scratch']
  #allocation2 [shape = 'f32[48,384]{1,0:T(8,128)}', space=vmem, size = 0x12000, scoped, tag = 'scratch operand']
  #allocation3 [shape = 'f32[48,128]{1,0:T(8,128)}', space=vmem, size = 0x6000, scoped, tag = 'scratch operand']
  %s0 = inlined_call_operand.vmem [shape: f32[48,24], index: 0, kind: input, shape index: {}]
  %s1 = inlined_call_operand.vmem [shape: f32[8,128], index: 1, kind: input, shape index: {}]
  %s2 = inlined_call_operand.vmem [shape: f32[24,32], index: 2, kind: input, shape index: {}]
  %s3 = inlined_call_operand.vmem [shape: f32[1,32], index: 3, kind: input, shape index: {}]
  %s4 = inlined_call_operand.vmem [shape: f32[32,32], index: 4, kind: input, shape index: {}]
  %s5 = inlined_call_operand.vmem [shape: f32[1,32], index: 5, kind: input, shape index: {}]
  %s6 = inlined_call_operand.vmem [shape: f32[32,384], index: 6, kind: input, shape index: {}]
  %s7 = inlined_call_operand.vmem [shape: f32[1,384], index: 7, kind: input, shape index: {}]
  %s8 = inlined_call_operand.vmem [shape: f32[128,384], index: 8, kind: input, shape index: {}]
  %s9 = inlined_call_operand.vmem [shape: f32[1,384], index: 9, kind: input, shape index: {}]
  %s10 = inlined_call_operand.vmem [shape: f32[128,32], index: 10, kind: input, shape index: {}]
  %s11 = inlined_call_operand.vmem [shape: f32[1,32], index: 11, kind: input, shape index: {}]
  %s12 = inlined_call_operand.vmem [shape: f32[32,10], index: 12, kind: input, shape index: {}]
  %s13 = inlined_call_operand.vmem [shape: f32[1,10], index: 13, kind: input, shape index: {}]
  %s14 = inlined_call_operand.hbm [shape: f32[48,10], index: 14, kind: output, shape index: {0}]
  %s15 = inlined_call_operand.vmem [shape: f32[8,128], index: 15, kind: output, shape index: {1}]
  %16 = xla_tuple %s14, %s15
  %s17 = sld [smem:[#allocation0]]
  $region74: #{cen_ddrqn_forward.1} parent=0
    _
  %s19 = ssub.s32 1, %s17
  %s20 = scalar_select 0, %s19, %s17
  $region1: #{cen_ddrqn_forward.1} parent=0
    #allocation4 [shape = 'u8[24576]{0}', space=vmem, size = 0x6000, scoped, tag = 'output window, operand 0, single buffered']
    #allocation5 [shape = 's32[1]{0}', space=sflag, size = 0x4, scoped, tag = 'scoped memory for cen_ddrqn_forward.1']
    %21 = vsyncpa [#allocation5], 0
    // Predicated region
    $region2: #{cen_ddrqn_forward.1} parent=1 // pred_check
      _
    $region3: #{cen_ddrqn_forward.1} parent=1 // pred_check_branch
      %23 = sbr.rel (0) target = $region5
    $region4: #{cen_ddrqn_forward.1} parent=1 // pred_region
      _
    $region5: #{cen_ddrqn_forward.1} parent=1 // pred_fallthru
      _
    // Predicated region
    $region6: #{cen_ddrqn_forward.1} parent=1 // pred_check
      _
    $region7: #{cen_ddrqn_forward.1} parent=1 // pred_check_branch
      %25 = sbr.rel (0) target = $region9
    $region8: #{cen_ddrqn_forward.1} parent=1 // pred_region
      _
    $region9: #{cen_ddrqn_forward.1} parent=1 // pred_fallthru
      _
    // Predicated region
    $region10: #{cen_ddrqn_forward.1} parent=1 // pred_check
      _
    $region11: #{cen_ddrqn_forward.1} parent=1 // pred_check_branch
      %27 = sbr.rel (0) target = $region13
    $region12: #{cen_ddrqn_forward.1} parent=1 // pred_region
      _
    $region13: #{cen_ddrqn_forward.1} parent=1 // pred_fallthru
      _
    // Predicated region
    $region14: #{cen_ddrqn_forward.1} parent=1 // pred_check
      _
    $region15: #{cen_ddrqn_forward.1} parent=1 // pred_check_branch
      %29 = sbr.rel (0) target = $region17
    $region16: #{cen_ddrqn_forward.1} parent=1 // pred_region
      _
    $region17: #{cen_ddrqn_forward.1} parent=1 // pred_fallthru
      _
    // Predicated region
    $region18: #{cen_ddrqn_forward.1} parent=1 // pred_check
      _
    $region19: #{cen_ddrqn_forward.1} parent=1 // pred_check_branch
      %31 = sbr.rel (0) target = $region21
    $region20: #{cen_ddrqn_forward.1} parent=1 // pred_region
      _
    $region21: #{cen_ddrqn_forward.1} parent=1 // pred_fallthru
      _
    // Predicated region
    $region22: #{cen_ddrqn_forward.1} parent=1 // pred_check
      _
    $region23: #{cen_ddrqn_forward.1} parent=1 // pred_check_branch
      %33 = sbr.rel (0) target = $region25
    $region24: #{cen_ddrqn_forward.1} parent=1 // pred_region
      _
    $region25: #{cen_ddrqn_forward.1} parent=1 // pred_fallthru
      _
    // Predicated region
    $region26: #{cen_ddrqn_forward.1} parent=1 // pred_check
      _
    $region27: #{cen_ddrqn_forward.1} parent=1 // pred_check_branch
      %35 = sbr.rel (0) target = $region29
    $region28: #{cen_ddrqn_forward.1} parent=1 // pred_region
      _
    $region29: #{cen_ddrqn_forward.1} parent=1 // pred_fallthru
      _
    // Predicated region
    $region30: #{cen_ddrqn_forward.1} parent=1 // pred_check
      _
    $region31: #{cen_ddrqn_forward.1} parent=1 // pred_check_branch
      %37 = sbr.rel (0) target = $region33
    $region32: #{cen_ddrqn_forward.1} parent=1 // pred_region
      _
    $region33: #{cen_ddrqn_forward.1} parent=1 // pred_fallthru
      _
    // Predicated region
    $region34: #{cen_ddrqn_forward.1} parent=1 // pred_check
      _
    $region35: #{cen_ddrqn_forward.1} parent=1 // pred_check_branch
      %39 = sbr.rel (0) target = $region37
    $region36: #{cen_ddrqn_forward.1} parent=1 // pred_region
      _
    $region37: #{cen_ddrqn_forward.1} parent=1 // pred_fallthru
      _
    // Predicated region
    $region38: #{cen_ddrqn_forward.1} parent=1 // pred_check
      _
    $region39: #{cen_ddrqn_forward.1} parent=1 // pred_check_branch
      %41 = sbr.rel (0) target = $region41
    $region40: #{cen_ddrqn_forward.1} parent=1 // pred_region
      _
    $region41: #{cen_ddrqn_forward.1} parent=1 // pred_fallthru
      _
    // Predicated region
    $region42: #{cen_ddrqn_forward.1} parent=1 // pred_check
      _
    $region43: #{cen_ddrqn_forward.1} parent=1 // pred_check_branch
      %43 = sbr.rel (0) target = $region45
    $region44: #{cen_ddrqn_forward.1} parent=1 // pred_region
      _
    $region45: #{cen_ddrqn_forward.1} parent=1 // pred_fallthru
      _
    // Predicated region
    $region46: #{cen_ddrqn_forward.1} parent=1 // pred_check
      _
    $region47: #{cen_ddrqn_forward.1} parent=1 // pred_check_branch
      %45 = sbr.rel (0) target = $region49
    $region48: #{cen_ddrqn_forward.1} parent=1 // pred_region
      _
    $region49: #{cen_ddrqn_forward.1} parent=1 // pred_fallthru
      _
    // Predicated region
    $region50: #{cen_ddrqn_forward.1} parent=1 // pred_check
      _
    $region51: #{cen_ddrqn_forward.1} parent=1 // pred_check_branch
      %47 = sbr.rel (0) target = $region53
    $region52: #{cen_ddrqn_forward.1} parent=1 // pred_region
      _
    $region53: #{cen_ddrqn_forward.1} parent=1 // pred_fallthru
      _
    // Predicated region
    $region54: #{cen_ddrqn_forward.1} parent=1 // pred_check
      _
    $region55: #{cen_ddrqn_forward.1} parent=1 // pred_check_branch
      %49 = sbr.rel (0) target = $region57
    $region56: #{cen_ddrqn_forward.1} parent=1 // pred_region
      _
    $region57: #{cen_ddrqn_forward.1} parent=1 // pred_fallthru
      _
    %v50 = vld [vmem:[%s0] sm:$0xff]
    %v51 = vld [vmem:[%s0 + $0x8] sm:$0xff]
    %v52 = vld [vmem:[%s0 + $0x10] sm:$0xff]
    %v53 = vld [vmem:[%s0 + $0x18] sm:$0xff]
    %v54 = vld [vmem:[%s0 + $0x20] sm:$0xff]
    %v55 = vld [vmem:[%s0 + $0x28] sm:$0xff]
    %v56 = vld [vmem:[%s2] sm:$0xff]
    %v57 = vld [vmem:[%s2 + $0x8] sm:$0xff]
    %v58 = vld [vmem:[%s2 + $0x10] sm:$0xff]
    %v59 = vld [vmem:[%s3] sm:$0x1]
    %v61 = vlaneseq
    %v62 = vshrl.u32 %v61, 7
    %v63 = vsub.s32 0, %v62
    %v64 = vrot.slane %v59, %v63
    %vm66 = vcmask 195584
    %v68 = vsel %vm66, %v50, 0
    %v71 = vsel %vm66, %v51, 0
    %v74 = vsel %vm66, %v52, 0
    %v77 = vsel %vm66, %v53, 0
    %v80 = vsel %vm66, %v54, 0
    %v83 = vsel %vm66, %v55, 0
    %85 = vmatprep.subr.mxu0 0.0
    %86 = vmatpush1.msra.mxu0 0.0
    %87 = vmatprep.subr.mxu0 0.0
    %88 = vmatpush1.msra.mxu0 0.0
    %89 = vmatprep.subr.mxu0 0.0
    %90 = vmatpush1.msra.mxu0 0.0
    %91 = vmatprep.subr.mxu0 0.0
    %92 = vmatpush1.msra.mxu0 0.0
    %93 = vmatprep.subr.mxu0 0.0
    %94 = vmatpush1.msra.mxu0 0.0
    %95 = vmatprep.subr.mxu0 0.0
    %96 = vmatpush1.msra.mxu0 0.0
    %97 = vmatprep.subr.mxu0 0.0
    %98 = vmatpush1.msra.mxu0 0.0
    %99 = vmatprep.subr.mxu0 0.0
    %100 = vmatpush1.msra.mxu0 0.0
    %101 = vmatprep.subr.mxu0 0.0
    %102 = vmatpush1.msra.mxu0 0.0
    %103 = vmatprep.subr.mxu0 0.0
    %104 = vmatpush1.msra.mxu0 0.0
    %105 = vmatprep.subr.mxu0 0.0
    %106 = vmatpush1.msra.mxu0 0.0
    %107 = vmatprep.subr.mxu0 0.0
    %108 = vmatpush1.msra.mxu0 0.0
    %109 = vmatprep.subr.mxu0 0.0
    %110 = vmatpush1.msra.mxu0 0.0
    %111 = vmatprep.subr.mxu0 0.0
    %112 = vmatpush1.msra.mxu0 %v58
    %113 = vmatprep.subr.mxu0 0.0
    %114 = vmatpush1.msra.mxu0 %v57
    %115 = vmatprep.subr.mxu0 0.0
    %116 = vmatpush1.msra.mxu0 %v56
    %117 = vmatprep.subr.mxu0 0.0
    %118 = vmatpush2.msra.mxu0 0.0
    %119 = vmatprep.subr.mxu0 0.0
    %120 = vmatpush2.msra.mxu0 0.0
    %121 = vmatprep.subr.mxu0 0.0
    %122 = vmatpush2.msra.mxu0 0.0
    %123 = vmatprep.subr.mxu0 0.0
    %124 = vmatpush2.msra.mxu0 0.0
    %125 = vmatprep.subr.mxu0 0.0
    %126 = vmatpush2.msra.mxu0 0.0
    %127 = vmatprep.subr.mxu0 0.0
    %128 = vmatpush2.msra.mxu0 0.0
    %129 = vmatprep.subr.mxu0 0.0
    %130 = vmatpush2.msra.mxu0 0.0
    %131 = vmatprep.subr.mxu0 0.0
    %132 = vmatpush2.msra.mxu0 0.0
    %133 = vmatprep.subr.mxu0 0.0
    %134 = vmatpush2.msra.mxu0 0.0
    %135 = vmatprep.subr.mxu0 0.0
    %136 = vmatpush2.msra.mxu0 0.0
    %137 = vmatprep.subr.mxu0 0.0
    %138 = vmatpush2.msra.mxu0 0.0
    %139 = vmatprep.subr.mxu0 0.0
    %140 = vmatpush2.msra.mxu0 0.0
    %141 = vmatprep.subr.mxu0 0.0
    %142 = vmatpush2.msra.mxu0 0.0
    %143 = vmatprep.subr.mxu0 0.0
    %144 = vmatpush2.msra.mxu0 0.0
    %145 = vmatprep.subr.mxu0 0.0
    %146 = vmatpush2.msra.mxu0 0.0
    %147 = vmatprep.subr.mxu0 0.0
    %148 = vmatpush2.msra.mxu0 0.0
    %149 = vmatprep.mubr.f32.mxu0 0.0
    %150 = vmatmul.mubr.f32.gmra.mxu0 %v68
    %v151 = vpop.f32.mrf.mxu0
    %v152 = vadd.f32 %v64, %v151
    %v153 = vpop.f32.mrf.mxu0
    %154 = vmatprep.mubr.f32.mxu0 0.0
    %155 = vmatmul.mubr.f32.gmra.mxu0 %v71
    %v156 = vpop.f32.mrf.mxu0
    %v157 = vadd.f32 %v64, %v156
    %v158 = vpop.f32.mrf.mxu0
    %159 = vmatprep.mubr.f32.mxu0 0.0
    %160 = vmatmul.mubr.f32.gmra.mxu0 %v74
    %v161 = vpop.f32.mrf.mxu0
    %v162 = vadd.f32 %v64, %v161
    %v163 = vpop.f32.mrf.mxu0
    %164 = vmatprep.mubr.f32.mxu0 0.0
    %165 = vmatmul.mubr.f32.gmra.mxu0 %v77
    %v166 = vpop.f32.mrf.mxu0
    %v167 = vadd.f32 %v64, %v166
    %v168 = vpop.f32.mrf.mxu0
    %169 = vmatprep.mubr.f32.mxu0 0.0
    %170 = vmatmul.mubr.f32.gmra.mxu0 %v80
    %v171 = vpop.f32.mrf.mxu0
    %v172 = vadd.f32 %v64, %v171
    %v173 = vpop.f32.mrf.mxu0
    %174 = vmatprep.mubr.f32.mxu0 0.0
    %175 = vmatmul.mubr.f32.gmra.mxu0 %v83
    %v176 = vpop.f32.mrf.mxu0
    %v177 = vadd.f32 %v64, %v176
    %v178 = vpop.f32.mrf.mxu0
    %179 = vdwg.mxu0
    %vm180 = vcmp.gt.f32.partialorder %v152, 0.0
    %vm181 = vcmp.gt.f32.partialorder %v157, 0.0
    %vm182 = vcmp.gt.f32.partialorder %v162, 0.0
    %vm183 = vcmp.gt.f32.partialorder %v167, 0.0
    %vm184 = vcmp.gt.f32.partialorder %v172, 0.0
    %vm185 = vcmp.gt.f32.partialorder %v177, 0.0
    %v186 = vmul.f32 %v152, 0.01
    %v187 = vmul.f32 %v157, 0.01
    %v188 = vmul.f32 %v162, 0.01
    %v189 = vmul.f32 %v167, 0.01
    %v190 = vmul.f32 %v172, 0.01
    %v191 = vmul.f32 %v177, 0.01
    %v192 = vsel %vm180, %v152, %v186
    %v193 = vsel %vm181, %v157, %v187
    %v194 = vsel %vm182, %v162, %v188
    %v195 = vsel %vm183, %v167, %v189
    %v196 = vsel %vm184, %v172, %v190
    %v197 = vsel %vm185, %v177, %v191
    %v198 = vld [vmem:[%s4] sm:$0xff]
    %v199 = vld [vmem:[%s4 + $0x8] sm:$0xff]
    %v200 = vld [vmem:[%s4 + $0x10] sm:$0xff]
    %v201 = vld [vmem:[%s4 + $0x18] sm:$0xff]
    %v202 = vld [vmem:[%s5] sm:$0x1]
    %v204 = vlaneseq
    %v205 = vshrl.u32 %v204, 7
    %v206 = vsub.s32 0, %v205
    %v207 = vrot.slane %v202, %v206
    %vm209 = vcmask 261120
    %v211 = vsel %vm209, %v192, 0
    %v214 = vsel %vm209, %v193, 0
    %v217 = vsel %vm209, %v194, 0
    %v220 = vsel %vm209, %v195, 0
    %v223 = vsel %vm209, %v196, 0
    %v226 = vsel %vm209, %v197, 0
    %228 = vmatprep.subr.mxu0 0.0
    %229 = vmatpush1.msra.mxu0 0.0
    %230 = vmatprep.subr.mxu0 0.0
    %231 = vmatpush1.msra.mxu0 0.0
    %232 = vmatprep.subr.mxu0 0.0
    %233 = vmatpush1.msra.mxu0 0.0
    %234 = vmatprep.subr.mxu0 0.0
    %235 = vmatpush1.msra.mxu0 0.0
    %236 = vmatprep.subr.mxu0 0.0
    %237 = vmatpush1.msra.mxu0 0.0
    %238 = vmatprep.subr.mxu0 0.0
    %239 = vmatpush1.msra.mxu0 0.0
    %240 = vmatprep.subr.mxu0 0.0
    %241 = vmatpush1.msra.mxu0 0.0
    %242 = vmatprep.subr.mxu0 0.0
    %243 = vmatpush1.msra.mxu0 0.0
    %244 = vmatprep.subr.mxu0 0.0
    %245 = vmatpush1.msra.mxu0 0.0
    %246 = vmatprep.subr.mxu0 0.0
    %247 = vmatpush1.msra.mxu0 0.0
    %248 = vmatprep.subr.mxu0 0.0
    %249 = vmatpush1.msra.mxu0 0.0
    %250 = vmatprep.subr.mxu0 0.0
    %251 = vmatpush1.msra.mxu0 0.0
    %252 = vmatprep.subr.mxu0 0.0
    %253 = vmatpush1.msra.mxu0 %v201
    %254 = vmatprep.subr.mxu0 0.0
    %255 = vmatpush1.msra.mxu0 %v200
    %256 = vmatprep.subr.mxu0 0.0
    %257 = vmatpush1.msra.mxu0 %v199
    %258 = vmatprep.subr.mxu0 0.0
    %259 = vmatpush1.msra.mxu0 %v198
    %260 = vmatprep.subr.mxu0 0.0
    %261 = vmatpush2.msra.mxu0 0.0
    %262 = vmatprep.subr.mxu0 0.0
    %263 = vmatpush2.msra.mxu0 0.0
    %264 = vmatprep.subr.mxu0 0.0
    %265 = vmatpush2.msra.mxu0 0.0
    %266 = vmatprep.subr.mxu0 0.0
    %267 = vmatpush2.msra.mxu0 0.0
    %268 = vmatprep.subr.mxu0 0.0
    %269 = vmatpush2.msra.mxu0 0.0
    %270 = vmatprep.subr.mxu0 0.0
    %271 = vmatpush2.msra.mxu0 0.0
    %272 = vmatprep.subr.mxu0 0.0
    %273 = vmatpush2.msra.mxu0 0.0
    %274 = vmatprep.subr.mxu0 0.0
    %275 = vmatpush2.msra.mxu0 0.0
    %276 = vmatprep.subr.mxu0 0.0
    %277 = vmatpush2.msra.mxu0 0.0
    %278 = vmatprep.subr.mxu0 0.0
    %279 = vmatpush2.msra.mxu0 0.0
    %280 = vmatprep.subr.mxu0 0.0
    %281 = vmatpush2.msra.mxu0 0.0
    %282 = vmatprep.subr.mxu0 0.0
    %283 = vmatpush2.msra.mxu0 0.0
    %284 = vmatprep.subr.mxu0 0.0
    %285 = vmatpush2.msra.mxu0 0.0
    %286 = vmatprep.subr.mxu0 0.0
    %287 = vmatpush2.msra.mxu0 0.0
    %288 = vmatprep.subr.mxu0 0.0
    %289 = vmatpush2.msra.mxu0 0.0
    %290 = vmatprep.subr.mxu0 0.0
    %291 = vmatpush2.msra.mxu0 0.0
    %292 = vmatprep.mubr.f32.mxu0 0.0
    %293 = vmatmul.mubr.f32.gmra.mxu0 %v211
    %v294 = vpop.f32.mrf.mxu0
    %v295 = vadd.f32 %v207, %v294
    %v296 = vpop.f32.mrf.mxu0
    %297 = vmatprep.mubr.f32.mxu0 0.0
    %298 = vmatmul.mubr.f32.gmra.mxu0 %v214
    %v299 = vpop.f32.mrf.mxu0
    %v300 = vadd.f32 %v207, %v299
    %v301 = vpop.f32.mrf.mxu0
    %302 = vmatprep.mubr.f32.mxu0 0.0
    %303 = vmatmul.mubr.f32.gmra.mxu0 %v217
    %v304 = vpop.f32.mrf.mxu0
    %v305 = vadd.f32 %v207, %v304
    %v306 = vpop.f32.mrf.mxu0
    %307 = vmatprep.mubr.f32.mxu0 0.0
    %308 = vmatmul.mubr.f32.gmra.mxu0 %v220
    %v309 = vpop.f32.mrf.mxu0
    %v310 = vadd.f32 %v207, %v309
    %v311 = vpop.f32.mrf.mxu0
    %312 = vmatprep.mubr.f32.mxu0 0.0
    %313 = vmatmul.mubr.f32.gmra.mxu0 %v223
    %v314 = vpop.f32.mrf.mxu0
    %v315 = vadd.f32 %v207, %v314
    %v316 = vpop.f32.mrf.mxu0
    %317 = vmatprep.mubr.f32.mxu0 0.0
    %318 = vmatmul.mubr.f32.gmra.mxu0 %v226
    %v319 = vpop.f32.mrf.mxu0
    %v320 = vadd.f32 %v207, %v319
    %v321 = vpop.f32.mrf.mxu0
    %322 = vdwg.mxu0
    %vm323 = vcmp.gt.f32.partialorder %v295, 0.0
    %vm324 = vcmp.gt.f32.partialorder %v300, 0.0
    %vm325 = vcmp.gt.f32.partialorder %v305, 0.0
    %vm326 = vcmp.gt.f32.partialorder %v310, 0.0
    %vm327 = vcmp.gt.f32.partialorder %v315, 0.0
    %vm328 = vcmp.gt.f32.partialorder %v320, 0.0
    %v329 = vmul.f32 %v295, 0.01
    %v330 = vmul.f32 %v300, 0.01
    %v331 = vmul.f32 %v305, 0.01
    %v332 = vmul.f32 %v310, 0.01
    %v333 = vmul.f32 %v315, 0.01
    %v334 = vmul.f32 %v320, 0.01
    %v335 = vsel %vm323, %v295, %v329
    %v336 = vsel %vm324, %v300, %v330
    %v337 = vsel %vm325, %v305, %v331
    %v338 = vsel %vm326, %v310, %v332
    %v339 = vsel %vm327, %v315, %v333
    %v340 = vsel %vm328, %v320, %v334
    %v341 = vld [vmem:[%s6] sm:$0xff]
    %v342 = vld [vmem:[%s6 + $0x8] sm:$0xff]
    %v343 = vld [vmem:[%s6 + $0x10] sm:$0xff]
    %v344 = vld [vmem:[%s6 + $0x18] sm:$0xff]
    %v345 = vld [vmem:[%s6 + $0x20] sm:$0xff]
    %v346 = vld [vmem:[%s6 + $0x28] sm:$0xff]
    %v347 = vld [vmem:[%s6 + $0x30] sm:$0xff]
    %v348 = vld [vmem:[%s6 + $0x38] sm:$0xff]
    %v349 = vld [vmem:[%s6 + $0x40] sm:$0xff]
    %v350 = vld [vmem:[%s6 + $0x48] sm:$0xff]
    %v351 = vld [vmem:[%s6 + $0x50] sm:$0xff]
    %v352 = vld [vmem:[%s6 + $0x58] sm:$0xff]
    %v353 = vld [vmem:[%s7] sm:$0x7]
    %v355 = vlaneseq
    %v356 = vshrl.u32 %v355, 7
    %v357 = vsub.s32 0, %v356
    %v358 = vrot.slane %v353, %v357
    %v359 = vlaneseq
    %v360 = vshrl.u32 %v359, 7
    %v361 = vsub.s32 1, %v360
    %v362 = vrot.slane %v353, %v361
    %v363 = vlaneseq
    %v364 = vshrl.u32 %v363, 7
    %v365 = vsub.s32 2, %v364
    %v366 = vrot.slane %v353, %v365
    %v371 = vsel %vm209, %v335, 0
    %v374 = vsel %vm209, %v336, 0
    %v377 = vsel %vm209, %v337, 0
    %v380 = vsel %vm209, %v338, 0
    %v383 = vsel %vm209, %v339, 0
    %v386 = vsel %vm209, %v340, 0
    %388 = vmatprep.subr.mxu0 0.0
    %389 = vmatpush1.msra.mxu0 0.0
    %390 = vmatprep.subr.mxu0 0.0
    %391 = vmatpush1.msra.mxu0 0.0
    %392 = vmatprep.subr.mxu0 0.0
    %393 = vmatpush1.msra.mxu0 0.0
    %394 = vmatprep.subr.mxu0 0.0
    %395 = vmatpush1.msra.mxu0 0.0
    %396 = vmatprep.subr.mxu0 0.0
    %397 = vmatpush1.msra.mxu0 0.0
    %398 = vmatprep.subr.mxu0 0.0
    %399 = vmatpush1.msra.mxu0 0.0
    %400 = vmatprep.subr.mxu0 0.0
    %401 = vmatpush1.msra.mxu0 0.0
    %402 = vmatprep.subr.mxu0 0.0
    %403 = vmatpush1.msra.mxu0 0.0
    %404 = vmatprep.subr.mxu0 0.0
    %405 = vmatpush1.msra.mxu0 0.0
    %406 = vmatprep.subr.mxu0 0.0
    %407 = vmatpush1.msra.mxu0 0.0
    %408 = vmatprep.subr.mxu0 0.0
    %409 = vmatpush1.msra.mxu0 0.0
    %410 = vmatprep.subr.mxu0 0.0
    %411 = vmatpush1.msra.mxu0 0.0
    %412 = vmatprep.subr.mxu0 %v351
    %413 = vmatpush1.msra.mxu0 %v350
    %414 = vmatprep.subr.mxu0 %v348
    %415 = vmatpush1.msra.mxu0 %v347
    %416 = vmatprep.subr.mxu0 %v345
    %417 = vmatpush1.msra.mxu0 %v344
    %418 = vmatprep.subr.mxu0 %v342
    %419 = vmatpush1.msra.mxu0 %v341
    %420 = vmatprep.subr.mxu0 0.0
    %421 = vmatpush2.msra.mxu0 0.0
    %422 = vmatprep.subr.mxu0 0.0
    %423 = vmatpush2.msra.mxu0 0.0
    %424 = vmatprep.subr.mxu0 0.0
    %425 = vmatpush2.msra.mxu0 0.0
    %426 = vmatprep.subr.mxu0 0.0
    %427 = vmatpush2.msra.mxu0 0.0
    %428 = vmatprep.subr.mxu0 0.0
    %429 = vmatpush2.msra.mxu0 0.0
    %430 = vmatprep.subr.mxu0 0.0
    %431 = vmatpush2.msra.mxu0 0.0
    %432 = vmatprep.subr.mxu0 0.0
    %433 = vmatpush2.msra.mxu0 0.0
    %434 = vmatprep.subr.mxu0 0.0
    %435 = vmatpush2.msra.mxu0 0.0
    %436 = vmatprep.subr.mxu0 0.0
    %437 = vmatpush2.msra.mxu0 0.0
    %438 = vmatprep.subr.mxu0 0.0
    %439 = vmatpush2.msra.mxu0 0.0
    %440 = vmatprep.subr.mxu0 0.0
    %441 = vmatpush2.msra.mxu0 0.0
    %442 = vmatprep.subr.mxu0 0.0
    %443 = vmatpush2.msra.mxu0 0.0
    %444 = vmatprep.subr.mxu0 0.0
    %445 = vmatpush2.msra.mxu0 0.0
    %446 = vmatprep.subr.mxu0 0.0
    %447 = vmatpush2.msra.mxu0 0.0
    %448 = vmatprep.subr.mxu0 0.0
    %449 = vmatpush2.msra.mxu0 0.0
    %450 = vmatprep.subr.mxu0 0.0
    %451 = vmatpush2.msra.mxu0 0.0
    %452 = vmatprep.mubr.f32.mxu0 0.0
    %453 = vmatmul.mubr.f32.gmra.mxu0 %v371
    %v454 = vpop.f32.mrf.mxu0
    %v455 = vadd.f32 %v358, %v454
    %v456 = vpop.f32.mrf.mxu0
    %v457 = vadd.f32 %v362, %v456
    %458 = vmatprep.mubr.f32.mxu0 0.0
    %459 = vmatmul.mubr.f32.gmra.mxu0 %v374
    %v460 = vpop.f32.mrf.mxu0
    %v461 = vadd.f32 %v358, %v460
    %v462 = vpop.f32.mrf.mxu0
    %v463 = vadd.f32 %v362, %v462
    %464 = vmatprep.mubr.f32.mxu0 0.0
    %465 = vmatmul.mubr.f32.gmra.mxu0 %v377
    %v466 = vpop.f32.mrf.mxu0
    %v467 = vadd.f32 %v358, %v466
    %v468 = vpop.f32.mrf.mxu0
    %v469 = vadd.f32 %v362, %v468
    %470 = vmatprep.mubr.f32.mxu0 0.0
    %471 = vmatmul.mubr.f32.gmra.mxu0 %v380
    %v472 = vpop.f32.mrf.mxu0
    %v473 = vadd.f32 %v358, %v472
    %v474 = vpop.f32.mrf.mxu0
    %v475 = vadd.f32 %v362, %v474
    %476 = vmatprep.mubr.f32.mxu0 0.0
    %477 = vmatmul.mubr.f32.gmra.mxu0 %v383
    %v478 = vpop.f32.mrf.mxu0
    %v479 = vadd.f32 %v358, %v478
    %v480 = vpop.f32.mrf.mxu0
    %v481 = vadd.f32 %v362, %v480
    %482 = vmatprep.mubr.f32.mxu0 0.0
    %483 = vmatmul.mubr.f32.gmra.mxu0 %v386
    %v484 = vpop.f32.mrf.mxu0
    %v485 = vadd.f32 %v358, %v484
    %v486 = vpop.f32.mrf.mxu0
    %v487 = vadd.f32 %v362, %v486
    %488 = vdwg.mxu0
    %489 = vmatprep.subr.mxu0 0.0
    %490 = vmatpush1.msra.mxu0 0.0
    %491 = vmatprep.subr.mxu0 0.0
    %492 = vmatpush1.msra.mxu0 0.0
    %493 = vmatprep.subr.mxu0 0.0
    %494 = vmatpush1.msra.mxu0 0.0
    %495 = vmatprep.subr.mxu0 0.0
    %496 = vmatpush1.msra.mxu0 0.0
    %497 = vmatprep.subr.mxu0 0.0
    %498 = vmatpush1.msra.mxu0 0.0
    %499 = vmatprep.subr.mxu0 0.0
    %500 = vmatpush1.msra.mxu0 0.0
    %501 = vmatprep.subr.mxu0 0.0
    %502 = vmatpush1.msra.mxu0 0.0
    %503 = vmatprep.subr.mxu0 0.0
    %504 = vmatpush1.msra.mxu0 0.0
    %505 = vmatprep.subr.mxu0 0.0
    %506 = vmatpush1.msra.mxu0 0.0
    %507 = vmatprep.subr.mxu0 0.0
    %508 = vmatpush1.msra.mxu0 0.0
    %509 = vmatprep.subr.mxu0 0.0
    %510 = vmatpush1.msra.mxu0 0.0
    %511 = vmatprep.subr.mxu0 0.0
    %512 = vmatpush1.msra.mxu0 0.0
    %513 = vmatprep.subr.mxu0 0.0
    %514 = vmatpush1.msra.mxu0 %v352
    %515 = vmatprep.subr.mxu0 0.0
    %516 = vmatpush1.msra.mxu0 %v349
    %517 = vmatprep.subr.mxu0 0.0
    %518 = vmatpush1.msra.mxu0 %v346
    %519 = vmatprep.subr.mxu0 0.0
    %520 = vmatpush1.msra.mxu0 %v343
    %521 = vmatprep.subr.mxu0 0.0
    %522 = vmatpush2.msra.mxu0 0.0
    %523 = vmatprep.subr.mxu0 0.0
    %524 = vmatpush2.msra.mxu0 0.0
    %525 = vmatprep.subr.mxu0 0.0
    %526 = vmatpush2.msra.mxu0 0.0
    %527 = vmatprep.subr.mxu0 0.0
    %528 = vmatpush2.msra.mxu0 0.0
    %529 = vmatprep.subr.mxu0 0.0
    %530 = vmatpush2.msra.mxu0 0.0
    %531 = vmatprep.subr.mxu0 0.0
    %532 = vmatpush2.msra.mxu0 0.0
    %533 = vmatprep.subr.mxu0 0.0
    %534 = vmatpush2.msra.mxu0 0.0
    %535 = vmatprep.subr.mxu0 0.0
    %536 = vmatpush2.msra.mxu0 0.0
    %537 = vmatprep.subr.mxu0 0.0
    %538 = vmatpush2.msra.mxu0 0.0
    %539 = vmatprep.subr.mxu0 0.0
    %540 = vmatpush2.msra.mxu0 0.0
    %541 = vmatprep.subr.mxu0 0.0
    %542 = vmatpush2.msra.mxu0 0.0
    %543 = vmatprep.subr.mxu0 0.0
    %544 = vmatpush2.msra.mxu0 0.0
    %545 = vmatprep.subr.mxu0 0.0
    %546 = vmatpush2.msra.mxu0 0.0
    %547 = vmatprep.subr.mxu0 0.0
    %548 = vmatpush2.msra.mxu0 0.0
    %549 = vmatprep.subr.mxu0 0.0
    %550 = vmatpush2.msra.mxu0 0.0
    %551 = vmatprep.subr.mxu0 0.0
    %552 = vmatpush2.msra.mxu0 0.0
    %553 = vmatprep.mubr.f32.mxu0 0.0
    %554 = vmatmul.mubr.f32.gmra.mxu0 %v371
    %v555 = vpop.f32.mrf.mxu0
    %v556 = vadd.f32 %v366, %v555
    %v557 = vpop.f32.mrf.mxu0
    %558 = vmatprep.mubr.f32.mxu0 0.0
    %559 = vmatmul.mubr.f32.gmra.mxu0 %v374
    %v560 = vpop.f32.mrf.mxu0
    %v561 = vadd.f32 %v366, %v560
    %v562 = vpop.f32.mrf.mxu0
    %563 = vmatprep.mubr.f32.mxu0 0.0
    %564 = vmatmul.mubr.f32.gmra.mxu0 %v377
    %v565 = vpop.f32.mrf.mxu0
    %v566 = vadd.f32 %v366, %v565
    %v567 = vpop.f32.mrf.mxu0
    %568 = vmatprep.mubr.f32.mxu0 0.0
    %569 = vmatmul.mubr.f32.gmra.mxu0 %v380
    %v570 = vpop.f32.mrf.mxu0
    %v571 = vadd.f32 %v366, %v570
    %v572 = vpop.f32.mrf.mxu0
    %573 = vmatprep.mubr.f32.mxu0 0.0
    %574 = vmatmul.mubr.f32.gmra.mxu0 %v383
    %v575 = vpop.f32.mrf.mxu0
    %v576 = vadd.f32 %v366, %v575
    %v577 = vpop.f32.mrf.mxu0
    %578 = vmatprep.mubr.f32.mxu0 0.0
    %579 = vmatmul.mubr.f32.gmra.mxu0 %v386
    %v580 = vpop.f32.mrf.mxu0
    %v581 = vadd.f32 %v366, %v580
    %v582 = vpop.f32.mrf.mxu0
    %583 = vdwg.mxu0
    %584 = vst [vmem:[#allocation2] sm:$0xff] %v455
    %585 = vst [vmem:[#allocation2 + $0x8] sm:$0xff] %v457
    %586 = vst [vmem:[#allocation2 + $0x10] sm:$0xff] %v556
    %587 = vst [vmem:[#allocation2 + $0x18] sm:$0xff] %v461
    %588 = vst [vmem:[#allocation2 + $0x20] sm:$0xff] %v463
    %589 = vst [vmem:[#allocation2 + $0x28] sm:$0xff] %v561
    %590 = vst [vmem:[#allocation2 + $0x30] sm:$0xff] %v467
    %591 = vst [vmem:[#allocation2 + $0x38] sm:$0xff] %v469
    %592 = vst [vmem:[#allocation2 + $0x40] sm:$0xff] %v566
    %593 = vst [vmem:[#allocation2 + $0x48] sm:$0xff] %v473
    %594 = vst [vmem:[#allocation2 + $0x50] sm:$0xff] %v475
    %595 = vst [vmem:[#allocation2 + $0x58] sm:$0xff] %v571
    %596 = vst [vmem:[#allocation2 + $0x60] sm:$0xff] %v479
    %597 = vst [vmem:[#allocation2 + $0x68] sm:$0xff] %v481
    %598 = vst [vmem:[#allocation2 + $0x70] sm:$0xff] %v576
    %599 = vst [vmem:[#allocation2 + $0x78] sm:$0xff] %v485
    %600 = vst [vmem:[#allocation2 + $0x80] sm:$0xff] %v487
    %601 = vst [vmem:[#allocation2 + $0x88] sm:$0xff] %v581
    %v602 = vld [vmem:[%s8] sm:$0xff]
    %v603 = vld [vmem:[%s8 + $0x8] sm:$0xff]
    %v604 = vld [vmem:[%s8 + $0x10] sm:$0xff]
    %v605 = vld [vmem:[%s8 + $0x18] sm:$0xff]
    %v606 = vld [vmem:[%s8 + $0x20] sm:$0xff]
    %v607 = vld [vmem:[%s8 + $0x28] sm:$0xff]
    %v608 = vld [vmem:[%s8 + $0x30] sm:$0xff]
    %v609 = vld [vmem:[%s8 + $0x38] sm:$0xff]
    %v610 = vld [vmem:[%s8 + $0x40] sm:$0xff]
    %v611 = vld [vmem:[%s8 + $0x48] sm:$0xff]
    %v612 = vld [vmem:[%s8 + $0x50] sm:$0xff]
    %v613 = vld [vmem:[%s8 + $0x58] sm:$0xff]
    %v614 = vld [vmem:[%s8 + $0x60] sm:$0xff]
    %v615 = vld [vmem:[%s8 + $0x68] sm:$0xff]
    %v616 = vld [vmem:[%s8 + $0x70] sm:$0xff]
    %v617 = vld [vmem:[%s8 + $0x78] sm:$0xff]
    %v618 = vld [vmem:[%s8 + $0x80] sm:$0xff]
    %v619 = vld [vmem:[%s8 + $0x88] sm:$0xff]
    %v620 = vld [vmem:[%s8 + $0x90] sm:$0xff]
    %v621 = vld [vmem:[%s8 + $0x98] sm:$0xff]
    %v622 = vld [vmem:[%s8 + $0xa0] sm:$0xff]
    %v623 = vld [vmem:[%s8 + $0xa8] sm:$0xff]
    %v624 = vld [vmem:[%s8 + $0xb0] sm:$0xff]
    %v625 = vld [vmem:[%s8 + $0xb8] sm:$0xff]
    %v626 = vld [vmem:[%s8 + $0xc0] sm:$0xff]
    %v627 = vld [vmem:[%s8 + $0xc8] sm:$0xff]
    %v628 = vld [vmem:[%s8 + $0xd0] sm:$0xff]
    %v629 = vld [vmem:[%s8 + $0xd8] sm:$0xff]
    %v630 = vld [vmem:[%s8 + $0xe0] sm:$0xff]
    %v631 = vld [vmem:[%s8 + $0xe8] sm:$0xff]
    %v632 = vld [vmem:[%s8 + $0xf0] sm:$0xff]
    %v633 = vld [vmem:[%s8 + $0xf8] sm:$0xff]
    %v634 = vld [vmem:[%s8 + $0x100] sm:$0xff]
    %v635 = vld [vmem:[%s8 + $0x108] sm:$0xff]
    %v636 = vld [vmem:[%s8 + $0x110] sm:$0xff]
    %v637 = vld [vmem:[%s8 + $0x118] sm:$0xff]
    %v638 = vld [vmem:[%s8 + $0x120] sm:$0xff]
    %v639 = vld [vmem:[%s8 + $0x128] sm:$0xff]
    %v640 = vld [vmem:[%s8 + $0x130] sm:$0xff]
    %v641 = vld [vmem:[%s8 + $0x138] sm:$0xff]
    %v642 = vld [vmem:[%s8 + $0x140] sm:$0xff]
    %v643 = vld [vmem:[%s8 + $0x148] sm:$0xff]
    %v644 = vld [vmem:[%s8 + $0x150] sm:$0xff]
    %v645 = vld [vmem:[%s8 + $0x158] sm:$0xff]
    %v646 = vld [vmem:[%s8 + $0x160] sm:$0xff]
    %v647 = vld [vmem:[%s8 + $0x168] sm:$0xff]
    %v648 = vld [vmem:[%s8 + $0x170] sm:$0xff]
    %v649 = vld [vmem:[%s8 + $0x178] sm:$0xff]
    %v650 = vld [vmem:[%s9] sm:$0x7]
    %v651 = vld [vmem:[%s1] sm:$0xff]
    %v652 = vld [vmem:[#allocation2] sm:$0xff]
    %v653 = vld [vmem:[#allocation2 + $0x8] sm:$0xff]
    %v654 = vld [vmem:[#allocation2 + $0x10] sm:$0xff]
    %v656 = vlaneseq
    %v657 = vshrl.u32 %v656, 7
    %v658 = vsub.s32 0, %v657
    %v659 = vrot.slane %v650, %v658
    %v660 = vlaneseq
    %v661 = vshrl.u32 %v660, 7
    %v662 = vsub.s32 1, %v661
    %v663 = vrot.slane %v650, %v662
    %v664 = vlaneseq
    %v665 = vshrl.u32 %v664, 7
    %v666 = vsub.s32 2, %v665
    %v667 = vrot.slane %v650, %v666
    %671 = vmatprep.subr.mxu0 %v648
    %672 = vmatpush1.msra.mxu0 %v647
    %673 = vmatprep.subr.mxu0 %v645
    %674 = vmatpush1.msra.mxu0 %v644
    %675 = vmatprep.subr.mxu0 %v642
    %676 = vmatpush1.msra.mxu0 %v641
    %677 = vmatprep.subr.mxu0 %v639
    %678 = vmatpush1.msra.mxu0 %v638
    %679 = vmatprep.subr.mxu0 %v636
    %680 = vmatpush1.msra.mxu0 %v635
    %681 = vmatprep.subr.mxu0 %v633
    %682 = vmatpush1.msra.mxu0 %v632
    %683 = vmatprep.subr.mxu0 %v630
    %684 = vmatpush1.msra.mxu0 %v629
    %685 = vmatprep.subr.mxu0 %v627
    %686 = vmatpush1.msra.mxu0 %v626
    %687 = vmatprep.subr.mxu0 %v624
    %688 = vmatpush1.msra.mxu0 %v623
    %689 = vmatprep.subr.mxu0 %v621
    %690 = vmatpush1.msra.mxu0 %v620
    %691 = vmatprep.subr.mxu0 %v618
    %692 = vmatpush1.msra.mxu0 %v617
    %693 = vmatprep.subr.mxu0 %v615
    %694 = vmatpush1.msra.mxu0 %v614
    %695 = vmatprep.subr.mxu0 %v612
    %696 = vmatpush1.msra.mxu0 %v611
    %697 = vmatprep.subr.mxu0 %v609
    %698 = vmatpush1.msra.mxu0 %v608
    %699 = vmatprep.subr.mxu0 %v606
    %700 = vmatpush1.msra.mxu0 %v605
    %701 = vmatprep.subr.mxu0 %v603
    %702 = vmatpush1.msra.mxu0 %v602
    %703 = vmatprep.subr.mxu0 0.0
    %704 = vmatpush2.msra.mxu0 0.0
    %705 = vmatprep.subr.mxu0 0.0
    %706 = vmatpush2.msra.mxu0 0.0
    %707 = vmatprep.subr.mxu0 0.0
    %708 = vmatpush2.msra.mxu0 0.0
    %709 = vmatprep.subr.mxu0 0.0
    %710 = vmatpush2.msra.mxu0 0.0
    %711 = vmatprep.subr.mxu0 0.0
    %712 = vmatpush2.msra.mxu0 0.0
    %713 = vmatprep.subr.mxu0 0.0
    %714 = vmatpush2.msra.mxu0 0.0
    %715 = vmatprep.subr.mxu0 0.0
    %716 = vmatpush2.msra.mxu0 0.0
    %717 = vmatprep.subr.mxu0 0.0
    %718 = vmatpush2.msra.mxu0 0.0
    %719 = vmatprep.subr.mxu0 0.0
    %720 = vmatpush2.msra.mxu0 0.0
    %721 = vmatprep.subr.mxu0 0.0
    %722 = vmatpush2.msra.mxu0 0.0
    %723 = vmatprep.subr.mxu0 0.0
    %724 = vmatpush2.msra.mxu0 0.0
    %725 = vmatprep.subr.mxu0 0.0
    %726 = vmatpush2.msra.mxu0 0.0
    %727 = vmatprep.subr.mxu0 0.0
    %728 = vmatpush2.msra.mxu0 0.0
    %729 = vmatprep.subr.mxu0 0.0
    %730 = vmatpush2.msra.mxu0 0.0
    %731 = vmatprep.subr.mxu0 0.0
    %732 = vmatpush2.msra.mxu0 0.0
    %733 = vmatprep.subr.mxu0 0.0
    %734 = vmatpush2.msra.mxu0 0.0
    %735 = vmatprep.mubr.f32.mxu0 0.0
    %736 = vmatmul.mubr.f32.gmra.mxu0 %v651
    %v737 = vpop.f32.mrf.mxu0
    %v738 = vadd.f32 %v659, %v737
    %v739 = vpop.f32.mrf.mxu0
    %v740 = vadd.f32 %v663, %v739
    %741 = vdwg.mxu0
    %742 = vmatprep.subr.mxu0 0.0
    %743 = vmatpush1.msra.mxu0 %v649
    %744 = vmatprep.subr.mxu0 0.0
    %745 = vmatpush1.msra.mxu0 %v646
    %746 = vmatprep.subr.mxu0 0.0
    %747 = vmatpush1.msra.mxu0 %v643
    %748 = vmatprep.subr.mxu0 0.0
    %749 = vmatpush1.msra.mxu0 %v640
    %750 = vmatprep.subr.mxu0 0.0
    %751 = vmatpush1.msra.mxu0 %v637
    %752 = vmatprep.subr.mxu0 0.0
    %753 = vmatpush1.msra.mxu0 %v634
    %754 = vmatprep.subr.mxu0 0.0
    %755 = vmatpush1.msra.mxu0 %v631
    %756 = vmatprep.subr.mxu0 0.0
    %757 = vmatpush1.msra.mxu0 %v628
    %758 = vmatprep.subr.mxu0 0.0
    %759 = vmatpush1.msra.mxu0 %v625
    %760 = vmatprep.subr.mxu0 0.0
    %761 = vmatpush1.msra.mxu0 %v622
    %762 = vmatprep.subr.mxu0 0.0
    %763 = vmatpush1.msra.mxu0 %v619
    %764 = vmatprep.subr.mxu0 0.0
    %765 = vmatpush1.msra.mxu0 %v616
    %766 = vmatprep.subr.mxu0 0.0
    %767 = vmatpush1.msra.mxu0 %v613
    %768 = vmatprep.subr.mxu0 0.0
    %769 = vmatpush1.msra.mxu0 %v610
    %770 = vmatprep.subr.mxu0 0.0
    %771 = vmatpush1.msra.mxu0 %v607
    %772 = vmatprep.subr.mxu0 0.0
    %773 = vmatpush1.msra.mxu0 %v604
    %774 = vmatprep.subr.mxu0 0.0
    %775 = vmatpush2.msra.mxu0 0.0
    %776 = vmatprep.subr.mxu0 0.0
    %777 = vmatpush2.msra.mxu0 0.0
    %778 = vmatprep.subr.mxu0 0.0
    %779 = vmatpush2.msra.mxu0 0.0
    %780 = vmatprep.subr.mxu0 0.0
    %781 = vmatpush2.msra.mxu0 0.0
    %782 = vmatprep.subr.mxu0 0.0
    %783 = vmatpush2.msra.mxu0 0.0
    %784 = vmatprep.subr.mxu0 0.0
    %785 = vmatpush2.msra.mxu0 0.0
    %786 = vmatprep.subr.mxu0 0.0
    %787 = vmatpush2.msra.mxu0 0.0
    %788 = vmatprep.subr.mxu0 0.0
    %789 = vmatpush2.msra.mxu0 0.0
    %790 = vmatprep.subr.mxu0 0.0
    %791 = vmatpush2.msra.mxu0 0.0
    %792 = vmatprep.subr.mxu0 0.0
    %793 = vmatpush2.msra.mxu0 0.0
    %794 = vmatprep.subr.mxu0 0.0
    %795 = vmatpush2.msra.mxu0 0.0
    %796 = vmatprep.subr.mxu0 0.0
    %797 = vmatpush2.msra.mxu0 0.0
    %798 = vmatprep.subr.mxu0 0.0
    %799 = vmatpush2.msra.mxu0 0.0
    %800 = vmatprep.subr.mxu0 0.0
    %801 = vmatpush2.msra.mxu0 0.0
    %802 = vmatprep.subr.mxu0 0.0
    %803 = vmatpush2.msra.mxu0 0.0
    %804 = vmatprep.subr.mxu0 0.0
    %805 = vmatpush2.msra.mxu0 0.0
    %806 = vmatprep.mubr.f32.mxu0 0.0
    %807 = vmatmul.mubr.f32.gmra.mxu0 %v651
    %v808 = vpop.f32.mrf.mxu0
    %v809 = vadd.f32 %v667, %v808
    %v810 = vpop.f32.mrf.mxu0
    %811 = vdwg.mxu0
    %v812 = vadd.f32 %v652, %v738
    %v813 = vxor.u32 %v812, 2147483648
    %v814 = vmul.f32 %v813, 1.442695
    %v815 = vpow.pop %v814
    %v816 = vadd.f32 %v815, 1.0
    %v817 = vrcp.pop %v816
    %v818 = vmul.f32 1.0, %v817
    %v819 = vadd.f32 %v653, %v740
    %v820 = vxor.u32 %v819, 2147483648
    %v821 = vmul.f32 %v820, 1.442695
    %v822 = vpow.pop %v821
    %v823 = vadd.f32 %v822, 1.0
    %v824 = vrcp.pop %v823
    %v825 = vmul.f32 1.0, %v824
    %v826 = vmul.f32 %v818, %v809
    %v827 = vadd.f32 %v654, %v826
    %v828 = vtanh.pop %v827
    %v829 = vsub.f32 1.0, %v825
    %v830 = vmul.f32 %v829, %v828
    %v831 = vmul.f32 %v825, %v651
    %v832 = vadd.f32 %v830, %v831
    %833 = vst [vmem:[#allocation3] sm:$0xff] %v832
    %v834 = vld [vmem:[#allocation2 + $0x18] sm:$0xff]
    %v835 = vld [vmem:[#allocation2 + $0x20] sm:$0xff]
    %v836 = vld [vmem:[#allocation2 + $0x28] sm:$0xff]
    %837 = vmatprep.subr.mxu0 %v648
    %838 = vmatpush1.msra.mxu0 %v647
    %839 = vmatprep.subr.mxu0 %v645
    %840 = vmatpush1.msra.mxu0 %v644
    %841 = vmatprep.subr.mxu0 %v642
    %842 = vmatpush1.msra.mxu0 %v641
    %843 = vmatprep.subr.mxu0 %v639
    %844 = vmatpush1.msra.mxu0 %v638
    %845 = vmatprep.subr.mxu0 %v636
    %846 = vmatpush1.msra.mxu0 %v635
    %847 = vmatprep.subr.mxu0 %v633
    %848 = vmatpush1.msra.mxu0 %v632
    %849 = vmatprep.subr.mxu0 %v630
    %850 = vmatpush1.msra.mxu0 %v629
    %851 = vmatprep.subr.mxu0 %v627
    %852 = vmatpush1.msra.mxu0 %v626
    %853 = vmatprep.subr.mxu0 %v624
    %854 = vmatpush1.msra.mxu0 %v623
    %855 = vmatprep.subr.mxu0 %v621
    %856 = vmatpush1.msra.mxu0 %v620
    %857 = vmatprep.subr.mxu0 %v618
    %858 = vmatpush1.msra.mxu0 %v617
    %859 = vmatprep.subr.mxu0 %v615
    %860 = vmatpush1.msra.mxu0 %v614
    %861 = vmatprep.subr.mxu0 %v612
    %862 = vmatpush1.msra.mxu0 %v611
    %863 = vmatprep.subr.mxu0 %v609
    %864 = vmatpush1.msra.mxu0 %v608
    %865 = vmatprep.subr.mxu0 %v606
    %866 = vmatpush1.msra.mxu0 %v605
    %867 = vmatprep.subr.mxu0 %v603
    %868 = vmatpush1.msra.mxu0 %v602
    %869 = vmatprep.subr.mxu0 0.0
    %870 = vmatpush2.msra.mxu0 0.0
    %871 = vmatprep.subr.mxu0 0.0
    %872 = vmatpush2.msra.mxu0 0.0
    %873 = vmatprep.subr.mxu0 0.0
    %874 = vmatpush2.msra.mxu0 0.0
    %875 = vmatprep.subr.mxu0 0.0
    %876 = vmatpush2.msra.mxu0 0.0
    %877 = vmatprep.subr.mxu0 0.0
    %878 = vmatpush2.msra.mxu0 0.0
    %879 = vmatprep.subr.mxu0 0.0
    %880 = vmatpush2.msra.mxu0 0.0
    %881 = vmatprep.subr.mxu0 0.0
    %882 = vmatpush2.msra.mxu0 0.0
    %883 = vmatprep.subr.mxu0 0.0
    %884 = vmatpush2.msra.mxu0 0.0
    %885 = vmatprep.subr.mxu0 0.0
    %886 = vmatpush2.msra.mxu0 0.0
    %887 = vmatprep.subr.mxu0 0.0
    %888 = vmatpush2.msra.mxu0 0.0
    %889 = vmatprep.subr.mxu0 0.0
    %890 = vmatpush2.msra.mxu0 0.0
    %891 = vmatprep.subr.mxu0 0.0
    %892 = vmatpush2.msra.mxu0 0.0
    %893 = vmatprep.subr.mxu0 0.0
    %894 = vmatpush2.msra.mxu0 0.0
    %895 = vmatprep.subr.mxu0 0.0
    %896 = vmatpush2.msra.mxu0 0.0
    %897 = vmatprep.subr.mxu0 0.0
    %898 = vmatpush2.msra.mxu0 0.0
    %899 = vmatprep.subr.mxu0 0.0
    %900 = vmatpush2.msra.mxu0 0.0
    %901 = vmatprep.mubr.f32.mxu0 0.0
    %902 = vmatmul.mubr.f32.gmra.mxu0 %v832
    %v903 = vpop.f32.mrf.mxu0
    %v904 = vadd.f32 %v659, %v903
    %v905 = vpop.f32.mrf.mxu0
    %v906 = vadd.f32 %v663, %v905
    %907 = vdwg.mxu0
    %908 = vmatprep.subr.mxu0 0.0
    %909 = vmatpush1.msra.mxu0 %v649
    %910 = vmatprep.subr.mxu0 0.0
    %911 = vmatpush1.msra.mxu0 %v646
    %912 = vmatprep.subr.mxu0 0.0
    %913 = vmatpush1.msra.mxu0 %v643
    %914 = vmatprep.subr.mxu0 0.0
    %915 = vmatpush1.msra.mxu0 %v640
    %916 = vmatprep.subr.mxu0 0.0
    %917 = vmatpush1.msra.mxu0 %v637
    %918 = vmatprep.subr.mxu0 0.0
    %919 = vmatpush1.msra.mxu0 %v634
    %920 = vmatprep.subr.mxu0 0.0
    %921 = vmatpush1.msra.mxu0 %v631
    %922 = vmatprep.subr.mxu0 0.0
    %923 = vmatpush1.msra.mxu0 %v628
    %924 = vmatprep.subr.mxu0 0.0
    %925 = vmatpush1.msra.mxu0 %v625
    %926 = vmatprep.subr.mxu0 0.0
    %927 = vmatpush1.msra.mxu0 %v622
    %928 = vmatprep.subr.mxu0 0.0
    %929 = vmatpush1.msra.mxu0 %v619
    %930 = vmatprep.subr.mxu0 0.0
    %931 = vmatpush1.msra.mxu0 %v616
    %932 = vmatprep.subr.mxu0 0.0
    %933 = vmatpush1.msra.mxu0 %v613
    %934 = vmatprep.subr.mxu0 0.0
    %935 = vmatpush1.msra.mxu0 %v610
    %936 = vmatprep.subr.mxu0 0.0
    %937 = vmatpush1.msra.mxu0 %v607
    %938 = vmatprep.subr.mxu0 0.0
    %939 = vmatpush1.msra.mxu0 %v604
    %940 = vmatprep.subr.mxu0 0.0
    %941 = vmatpush2.msra.mxu0 0.0
    %942 = vmatprep.subr.mxu0 0.0
    %943 = vmatpush2.msra.mxu0 0.0
    %944 = vmatprep.subr.mxu0 0.0
    %945 = vmatpush2.msra.mxu0 0.0
    %946 = vmatprep.subr.mxu0 0.0
    %947 = vmatpush2.msra.mxu0 0.0
    %948 = vmatprep.subr.mxu0 0.0
    %949 = vmatpush2.msra.mxu0 0.0
    %950 = vmatprep.subr.mxu0 0.0
    %951 = vmatpush2.msra.mxu0 0.0
    %952 = vmatprep.subr.mxu0 0.0
    %953 = vmatpush2.msra.mxu0 0.0
    %954 = vmatprep.subr.mxu0 0.0
    %955 = vmatpush2.msra.mxu0 0.0
    %956 = vmatprep.subr.mxu0 0.0
    %957 = vmatpush2.msra.mxu0 0.0
    %958 = vmatprep.subr.mxu0 0.0
    %959 = vmatpush2.msra.mxu0 0.0
    %960 = vmatprep.subr.mxu0 0.0
    %961 = vmatpush2.msra.mxu0 0.0
    %962 = vmatprep.subr.mxu0 0.0
    %963 = vmatpush2.msra.mxu0 0.0
    %964 = vmatprep.subr.mxu0 0.0
    %965 = vmatpush2.msra.mxu0 0.0
    %966 = vmatprep.subr.mxu0 0.0
    %967 = vmatpush2.msra.mxu0 0.0
    %968 = vmatprep.subr.mxu0 0.0
    %969 = vmatpush2.msra.mxu0 0.0
    %970 = vmatprep.subr.mxu0 0.0
    %971 = vmatpush2.msra.mxu0 0.0
    %972 = vmatprep.mubr.f32.mxu0 0.0
    %973 = vmatmul.mubr.f32.gmra.mxu0 %v832
    %v974 = vpop.f32.mrf.mxu0
    %v975 = vadd.f32 %v667, %v974
    %v976 = vpop.f32.mrf.mxu0
    %977 = vdwg.mxu0
    %v978 = vadd.f32 %v834, %v904
    %v979 = vxor.u32 %v978, 2147483648
    %v980 = vmul.f32 %v979, 1.442695
    %v981 = vpow.pop %v980
    %v982 = vadd.f32 %v981, 1.0
    %v983 = vrcp.pop %v982
    %v984 = vmul.f32 1.0, %v983
    %v985 = vadd.f32 %v835, %v906
    %v986 = vxor.u32 %v985, 2147483648
    %v987 = vmul.f32 %v986, 1.442695
    %v988 = vpow.pop %v987
    %v989 = vadd.f32 %v988, 1.0
    %v990 = vrcp.pop %v989
    %v991 = vmul.f32 1.0, %v990
    %v992 = vmul.f32 %v984, %v975
    %v993 = vadd.f32 %v836, %v992
    %v994 = vtanh.pop %v993
    %v995 = vsub.f32 1.0, %v991
    %v996 = vmul.f32 %v995, %v994
    %v997 = vmul.f32 %v991, %v832
    %v998 = vadd.f32 %v996, %v997
    %999 = vst [vmem:[#allocation3 + $0x8] sm:$0xff] %v998
    %v1000 = vld [vmem:[#allocation2 + $0x30] sm:$0xff]
    %v1001 = vld [vmem:[#allocation2 + $0x38] sm:$0xff]
    %v1002 = vld [vmem:[#allocation2 + $0x40] sm:$0xff]
    %1003 = vmatprep.subr.mxu0 %v648
    %1004 = vmatpush1.msra.mxu0 %v647
    %1005 = vmatprep.subr.mxu0 %v645
    %1006 = vmatpush1.msra.mxu0 %v644
    %1007 = vmatprep.subr.mxu0 %v642
    %1008 = vmatpush1.msra.mxu0 %v641
    %1009 = vmatprep.subr.mxu0 %v639
    %1010 = vmatpush1.msra.mxu0 %v638
    %1011 = vmatprep.subr.mxu0 %v636
    %1012 = vmatpush1.msra.mxu0 %v635
    %1013 = vmatprep.subr.mxu0 %v633
    %1014 = vmatpush1.msra.mxu0 %v632
    %1015 = vmatprep.subr.mxu0 %v630
    %1016 = vmatpush1.msra.mxu0 %v629
    %1017 = vmatprep.subr.mxu0 %v627
    %1018 = vmatpush1.msra.mxu0 %v626
    %1019 = vmatprep.subr.mxu0 %v624
    %1020 = vmatpush1.msra.mxu0 %v623
    %1021 = vmatprep.subr.mxu0 %v621
    %1022 = vmatpush1.msra.mxu0 %v620
    %1023 = vmatprep.subr.mxu0 %v618
    %1024 = vmatpush1.msra.mxu0 %v617
    %1025 = vmatprep.subr.mxu0 %v615
    %1026 = vmatpush1.msra.mxu0 %v614
    %1027 = vmatprep.subr.mxu0 %v612
    %1028 = vmatpush1.msra.mxu0 %v611
    %1029 = vmatprep.subr.mxu0 %v609
    %1030 = vmatpush1.msra.mxu0 %v608
    %1031 = vmatprep.subr.mxu0 %v606
    %1032 = vmatpush1.msra.mxu0 %v605
    %1033 = vmatprep.subr.mxu0 %v603
    %1034 = vmatpush1.msra.mxu0 %v602
    %1035 = vmatprep.subr.mxu0 0.0
    %1036 = vmatpush2.msra.mxu0 0.0
    %1037 = vmatprep.subr.mxu0 0.0
    %1038 = vmatpush2.msra.mxu0 0.0
    %1039 = vmatprep.subr.mxu0 0.0
    %1040 = vmatpush2.msra.mxu0 0.0
    %1041 = vmatprep.subr.mxu0 0.0
    %1042 = vmatpush2.msra.mxu0 0.0
    %1043 = vmatprep.subr.mxu0 0.0
    %1044 = vmatpush2.msra.mxu0 0.0
    %1045 = vmatprep.subr.mxu0 0.0
    %1046 = vmatpush2.msra.mxu0 0.0
    %1047 = vmatprep.subr.mxu0 0.0
    %1048 = vmatpush2.msra.mxu0 0.0
    %1049 = vmatprep.subr.mxu0 0.0
    %1050 = vmatpush2.msra.mxu0 0.0
    %1051 = vmatprep.subr.mxu0 0.0
    %1052 = vmatpush2.msra.mxu0 0.0
    %1053 = vmatprep.subr.mxu0 0.0
    %1054 = vmatpush2.msra.mxu0 0.0
    %1055 = vmatprep.subr.mxu0 0.0
    %1056 = vmatpush2.msra.mxu0 0.0
    %1057 = vmatprep.subr.mxu0 0.0
    %1058 = vmatpush2.msra.mxu0 0.0
    %1059 = vmatprep.subr.mxu0 0.0
    %1060 = vmatpush2.msra.mxu0 0.0
    %1061 = vmatprep.subr.mxu0 0.0
    %1062 = vmatpush2.msra.mxu0 0.0
    %1063 = vmatprep.subr.mxu0 0.0
    %1064 = vmatpush2.msra.mxu0 0.0
    %1065 = vmatprep.subr.mxu0 0.0
    %1066 = vmatpush2.msra.mxu0 0.0
    %1067 = vmatprep.mubr.f32.mxu0 0.0
    %1068 = vmatmul.mubr.f32.gmra.mxu0 %v998
    %v1069 = vpop.f32.mrf.mxu0
    %v1070 = vadd.f32 %v659, %v1069
    %v1071 = vpop.f32.mrf.mxu0
    %v1072 = vadd.f32 %v663, %v1071
    %1073 = vdwg.mxu0
    %1074 = vmatprep.subr.mxu0 0.0
    %1075 = vmatpush1.msra.mxu0 %v649
    %1076 = vmatprep.subr.mxu0 0.0
    %1077 = vmatpush1.msra.mxu0 %v646
    %1078 = vmatprep.subr.mxu0 0.0
    %1079 = vmatpush1.msra.mxu0 %v643
    %1080 = vmatprep.subr.mxu0 0.0
    %1081 = vmatpush1.msra.mxu0 %v640
    %1082 = vmatprep.subr.mxu0 0.0
    %1083 = vmatpush1.msra.mxu0 %v637
    %1084 = vmatprep.subr.mxu0 0.0
    %1085 = vmatpush1.msra.mxu0 %v634
    %1086 = vmatprep.subr.mxu0 0.0
    %1087 = vmatpush1.msra.mxu0 %v631
    %1088 = vmatprep.subr.mxu0 0.0
    %1089 = vmatpush1.msra.mxu0 %v628
    %1090 = vmatprep.subr.mxu0 0.0
    %1091 = vmatpush1.msra.mxu0 %v625
    %1092 = vmatprep.subr.mxu0 0.0
    %1093 = vmatpush1.msra.mxu0 %v622
    %1094 = vmatprep.subr.mxu0 0.0
    %1095 = vmatpush1.msra.mxu0 %v619
    %1096 = vmatprep.subr.mxu0 0.0
    %1097 = vmatpush1.msra.mxu0 %v616
    %1098 = vmatprep.subr.mxu0 0.0
    %1099 = vmatpush1.msra.mxu0 %v613
    %1100 = vmatprep.subr.mxu0 0.0
    %1101 = vmatpush1.msra.mxu0 %v610
    %1102 = vmatprep.subr.mxu0 0.0
    %1103 = vmatpush1.msra.mxu0 %v607
    %1104 = vmatprep.subr.mxu0 0.0
    %1105 = vmatpush1.msra.mxu0 %v604
    %1106 = vmatprep.subr.mxu0 0.0
    %1107 = vmatpush2.msra.mxu0 0.0
    %1108 = vmatprep.subr.mxu0 0.0
    %1109 = vmatpush2.msra.mxu0 0.0
    %1110 = vmatprep.subr.mxu0 0.0
    %1111 = vmatpush2.msra.mxu0 0.0
    %1112 = vmatprep.subr.mxu0 0.0
    %1113 = vmatpush2.msra.mxu0 0.0
    %1114 = vmatprep.subr.mxu0 0.0
    %1115 = vmatpush2.msra.mxu0 0.0
    %1116 = vmatprep.subr.mxu0 0.0
    %1117 = vmatpush2.msra.mxu0 0.0
    %1118 = vmatprep.subr.mxu0 0.0
    %1119 = vmatpush2.msra.mxu0 0.0
    %1120 = vmatprep.subr.mxu0 0.0
    %1121 = vmatpush2.msra.mxu0 0.0
    %1122 = vmatprep.subr.mxu0 0.0
    %1123 = vmatpush2.msra.mxu0 0.0
    %1124 = vmatprep.subr.mxu0 0.0
    %1125 = vmatpush2.msra.mxu0 0.0
    %1126 = vmatprep.subr.mxu0 0.0
    %1127 = vmatpush2.msra.mxu0 0.0
    %1128 = vmatprep.subr.mxu0 0.0
    %1129 = vmatpush2.msra.mxu0 0.0
    %1130 = vmatprep.subr.mxu0 0.0
    %1131 = vmatpush2.msra.mxu0 0.0
    %1132 = vmatprep.subr.mxu0 0.0
    %1133 = vmatpush2.msra.mxu0 0.0
    %1134 = vmatprep.subr.mxu0 0.0
    %1135 = vmatpush2.msra.mxu0 0.0
    %1136 = vmatprep.subr.mxu0 0.0
    %1137 = vmatpush2.msra.mxu0 0.0
    %1138 = vmatprep.mubr.f32.mxu0 0.0
    %1139 = vmatmul.mubr.f32.gmra.mxu0 %v998
    %v1140 = vpop.f32.mrf.mxu0
    %v1141 = vadd.f32 %v667, %v1140
    %v1142 = vpop.f32.mrf.mxu0
    %1143 = vdwg.mxu0
    %v1144 = vadd.f32 %v1000, %v1070
    %v1145 = vxor.u32 %v1144, 2147483648
    %v1146 = vmul.f32 %v1145, 1.442695
    %v1147 = vpow.pop %v1146
    %v1148 = vadd.f32 %v1147, 1.0
    %v1149 = vrcp.pop %v1148
    %v1150 = vmul.f32 1.0, %v1149
    %v1151 = vadd.f32 %v1001, %v1072
    %v1152 = vxor.u32 %v1151, 2147483648
    %v1153 = vmul.f32 %v1152, 1.442695
    %v1154 = vpow.pop %v1153
    %v1155 = vadd.f32 %v1154, 1.0
    %v1156 = vrcp.pop %v1155
    %v1157 = vmul.f32 1.0, %v1156
    %v1158 = vmul.f32 %v1150, %v1141
    %v1159 = vadd.f32 %v1002, %v1158
    %v1160 = vtanh.pop %v1159
    %v1161 = vsub.f32 1.0, %v1157
    %v1162 = vmul.f32 %v1161, %v1160
    %v1163 = vmul.f32 %v1157, %v998
    %v1164 = vadd.f32 %v1162, %v1163
    %1165 = vst [vmem:[#allocation3 + $0x10] sm:$0xff] %v1164
    %v1166 = vld [vmem:[#allocation2 + $0x48] sm:$0xff]
    %v1167 = vld [vmem:[#allocation2 + $0x50] sm:$0xff]
    %v1168 = vld [vmem:[#allocation2 + $0x58] sm:$0xff]
    %1169 = vmatprep.subr.mxu0 %v648
    %1170 = vmatpush1.msra.mxu0 %v647
    %1171 = vmatprep.subr.mxu0 %v645
    %1172 = vmatpush1.msra.mxu0 %v644
    %1173 = vmatprep.subr.mxu0 %v642
    %1174 = vmatpush1.msra.mxu0 %v641
    %1175 = vmatprep.subr.mxu0 %v639
    %1176 = vmatpush1.msra.mxu0 %v638
    %1177 = vmatprep.subr.mxu0 %v636
    %1178 = vmatpush1.msra.mxu0 %v635
    %1179 = vmatprep.subr.mxu0 %v633
    %1180 = vmatpush1.msra.mxu0 %v632
    %1181 = vmatprep.subr.mxu0 %v630
    %1182 = vmatpush1.msra.mxu0 %v629
    %1183 = vmatprep.subr.mxu0 %v627
    %1184 = vmatpush1.msra.mxu0 %v626
    %1185 = vmatprep.subr.mxu0 %v624
    %1186 = vmatpush1.msra.mxu0 %v623
    %1187 = vmatprep.subr.mxu0 %v621
    %1188 = vmatpush1.msra.mxu0 %v620
    %1189 = vmatprep.subr.mxu0 %v618
    %1190 = vmatpush1.msra.mxu0 %v617
    %1191 = vmatprep.subr.mxu0 %v615
    %1192 = vmatpush1.msra.mxu0 %v614
    %1193 = vmatprep.subr.mxu0 %v612
    %1194 = vmatpush1.msra.mxu0 %v611
    %1195 = vmatprep.subr.mxu0 %v609
    %1196 = vmatpush1.msra.mxu0 %v608
    %1197 = vmatprep.subr.mxu0 %v606
    %1198 = vmatpush1.msra.mxu0 %v605
    %1199 = vmatprep.subr.mxu0 %v603
    %1200 = vmatpush1.msra.mxu0 %v602
    %1201 = vmatprep.subr.mxu0 0.0
    %1202 = vmatpush2.msra.mxu0 0.0
    %1203 = vmatprep.subr.mxu0 0.0
    %1204 = vmatpush2.msra.mxu0 0.0
    %1205 = vmatprep.subr.mxu0 0.0
    %1206 = vmatpush2.msra.mxu0 0.0
    %1207 = vmatprep.subr.mxu0 0.0
    %1208 = vmatpush2.msra.mxu0 0.0
    %1209 = vmatprep.subr.mxu0 0.0
    %1210 = vmatpush2.msra.mxu0 0.0
    %1211 = vmatprep.subr.mxu0 0.0
    %1212 = vmatpush2.msra.mxu0 0.0
    %1213 = vmatprep.subr.mxu0 0.0
    %1214 = vmatpush2.msra.mxu0 0.0
    %1215 = vmatprep.subr.mxu0 0.0
    %1216 = vmatpush2.msra.mxu0 0.0
    %1217 = vmatprep.subr.mxu0 0.0
    %1218 = vmatpush2.msra.mxu0 0.0
    %1219 = vmatprep.subr.mxu0 0.0
    %1220 = vmatpush2.msra.mxu0 0.0
    %1221 = vmatprep.subr.mxu0 0.0
    %1222 = vmatpush2.msra.mxu0 0.0
    %1223 = vmatprep.subr.mxu0 0.0
    %1224 = vmatpush2.msra.mxu0 0.0
    %1225 = vmatprep.subr.mxu0 0.0
    %1226 = vmatpush2.msra.mxu0 0.0
    %1227 = vmatprep.subr.mxu0 0.0
    %1228 = vmatpush2.msra.mxu0 0.0
    %1229 = vmatprep.subr.mxu0 0.0
    %1230 = vmatpush2.msra.mxu0 0.0
    %1231 = vmatprep.subr.mxu0 0.0
    %1232 = vmatpush2.msra.mxu0 0.0
    %1233 = vmatprep.mubr.f32.mxu0 0.0
    %1234 = vmatmul.mubr.f32.gmra.mxu0 %v1164
    %v1235 = vpop.f32.mrf.mxu0
    %v1236 = vadd.f32 %v659, %v1235
    %v1237 = vpop.f32.mrf.mxu0
    %v1238 = vadd.f32 %v663, %v1237
    %1239 = vdwg.mxu0
    %1240 = vmatprep.subr.mxu0 0.0
    %1241 = vmatpush1.msra.mxu0 %v649
    %1242 = vmatprep.subr.mxu0 0.0
    %1243 = vmatpush1.msra.mxu0 %v646
    %1244 = vmatprep.subr.mxu0 0.0
    %1245 = vmatpush1.msra.mxu0 %v643
    %1246 = vmatprep.subr.mxu0 0.0
    %1247 = vmatpush1.msra.mxu0 %v640
    %1248 = vmatprep.subr.mxu0 0.0
    %1249 = vmatpush1.msra.mxu0 %v637
    %1250 = vmatprep.subr.mxu0 0.0
    %1251 = vmatpush1.msra.mxu0 %v634
    %1252 = vmatprep.subr.mxu0 0.0
    %1253 = vmatpush1.msra.mxu0 %v631
    %1254 = vmatprep.subr.mxu0 0.0
    %1255 = vmatpush1.msra.mxu0 %v628
    %1256 = vmatprep.subr.mxu0 0.0
    %1257 = vmatpush1.msra.mxu0 %v625
    %1258 = vmatprep.subr.mxu0 0.0
    %1259 = vmatpush1.msra.mxu0 %v622
    %1260 = vmatprep.subr.mxu0 0.0
    %1261 = vmatpush1.msra.mxu0 %v619
    %1262 = vmatprep.subr.mxu0 0.0
    %1263 = vmatpush1.msra.mxu0 %v616
    %1264 = vmatprep.subr.mxu0 0.0
    %1265 = vmatpush1.msra.mxu0 %v613
    %1266 = vmatprep.subr.mxu0 0.0
    %1267 = vmatpush1.msra.mxu0 %v610
    %1268 = vmatprep.subr.mxu0 0.0
    %1269 = vmatpush1.msra.mxu0 %v607
    %1270 = vmatprep.subr.mxu0 0.0
    %1271 = vmatpush1.msra.mxu0 %v604
    %1272 = vmatprep.subr.mxu0 0.0
    %1273 = vmatpush2.msra.mxu0 0.0
    %1274 = vmatprep.subr.mxu0 0.0
    %1275 = vmatpush2.msra.mxu0 0.0
    %1276 = vmatprep.subr.mxu0 0.0
    %1277 = vmatpush2.msra.mxu0 0.0
    %1278 = vmatprep.subr.mxu0 0.0
    %1279 = vmatpush2.msra.mxu0 0.0
    %1280 = vmatprep.subr.mxu0 0.0
    %1281 = vmatpush2.msra.mxu0 0.0
    %1282 = vmatprep.subr.mxu0 0.0
    %1283 = vmatpush2.msra.mxu0 0.0
    %1284 = vmatprep.subr.mxu0 0.0
    %1285 = vmatpush2.msra.mxu0 0.0
    %1286 = vmatprep.subr.mxu0 0.0
    %1287 = vmatpush2.msra.mxu0 0.0
    %1288 = vmatprep.subr.mxu0 0.0
    %1289 = vmatpush2.msra.mxu0 0.0
    %1290 = vmatprep.subr.mxu0 0.0
    %1291 = vmatpush2.msra.mxu0 0.0
    %1292 = vmatprep.subr.mxu0 0.0
    %1293 = vmatpush2.msra.mxu0 0.0
    %1294 = vmatprep.subr.mxu0 0.0
    %1295 = vmatpush2.msra.mxu0 0.0
    %1296 = vmatprep.subr.mxu0 0.0
    %1297 = vmatpush2.msra.mxu0 0.0
    %1298 = vmatprep.subr.mxu0 0.0
    %1299 = vmatpush2.msra.mxu0 0.0
    %1300 = vmatprep.subr.mxu0 0.0
    %1301 = vmatpush2.msra.mxu0 0.0
    %1302 = vmatprep.subr.mxu0 0.0
    %1303 = vmatpush2.msra.mxu0 0.0
    %1304 = vmatprep.mubr.f32.mxu0 0.0
    %1305 = vmatmul.mubr.f32.gmra.mxu0 %v1164
    %v1306 = vpop.f32.mrf.mxu0
    %v1307 = vadd.f32 %v667, %v1306
    %v1308 = vpop.f32.mrf.mxu0
    %1309 = vdwg.mxu0
    %v1310 = vadd.f32 %v1166, %v1236
    %v1311 = vxor.u32 %v1310, 2147483648
    %v1312 = vmul.f32 %v1311, 1.442695
    %v1313 = vpow.pop %v1312
    %v1314 = vadd.f32 %v1313, 1.0
    %v1315 = vrcp.pop %v1314
    %v1316 = vmul.f32 1.0, %v1315
    %v1317 = vadd.f32 %v1167, %v1238
    %v1318 = vxor.u32 %v1317, 2147483648
    %v1319 = vmul.f32 %v1318, 1.442695
    %v1320 = vpow.pop %v1319
    %v1321 = vadd.f32 %v1320, 1.0
    %v1322 = vrcp.pop %v1321
    %v1323 = vmul.f32 1.0, %v1322
    %v1324 = vmul.f32 %v1316, %v1307
    %v1325 = vadd.f32 %v1168, %v1324
    %v1326 = vtanh.pop %v1325
    %v1327 = vsub.f32 1.0, %v1323
    %v1328 = vmul.f32 %v1327, %v1326
    %v1329 = vmul.f32 %v1323, %v1164
    %v1330 = vadd.f32 %v1328, %v1329
    %1331 = vst [vmem:[#allocation3 + $0x18] sm:$0xff] %v1330
    %v1332 = vld [vmem:[#allocation2 + $0x60] sm:$0xff]
    %v1333 = vld [vmem:[#allocation2 + $0x68] sm:$0xff]
    %v1334 = vld [vmem:[#allocation2 + $0x70] sm:$0xff]
    %1335 = vmatprep.subr.mxu0 %v648
    %1336 = vmatpush1.msra.mxu0 %v647
    %1337 = vmatprep.subr.mxu0 %v645
    %1338 = vmatpush1.msra.mxu0 %v644
    %1339 = vmatprep.subr.mxu0 %v642
    %1340 = vmatpush1.msra.mxu0 %v641
    %1341 = vmatprep.subr.mxu0 %v639
    %1342 = vmatpush1.msra.mxu0 %v638
    %1343 = vmatprep.subr.mxu0 %v636
    %1344 = vmatpush1.msra.mxu0 %v635
    %1345 = vmatprep.subr.mxu0 %v633
    %1346 = vmatpush1.msra.mxu0 %v632
    %1347 = vmatprep.subr.mxu0 %v630
    %1348 = vmatpush1.msra.mxu0 %v629
    %1349 = vmatprep.subr.mxu0 %v627
    %1350 = vmatpush1.msra.mxu0 %v626
    %1351 = vmatprep.subr.mxu0 %v624
    %1352 = vmatpush1.msra.mxu0 %v623
    %1353 = vmatprep.subr.mxu0 %v621
    %1354 = vmatpush1.msra.mxu0 %v620
    %1355 = vmatprep.subr.mxu0 %v618
    %1356 = vmatpush1.msra.mxu0 %v617
    %1357 = vmatprep.subr.mxu0 %v615
    %1358 = vmatpush1.msra.mxu0 %v614
    %1359 = vmatprep.subr.mxu0 %v612
    %1360 = vmatpush1.msra.mxu0 %v611
    %1361 = vmatprep.subr.mxu0 %v609
    %1362 = vmatpush1.msra.mxu0 %v608
    %1363 = vmatprep.subr.mxu0 %v606
    %1364 = vmatpush1.msra.mxu0 %v605
    %1365 = vmatprep.subr.mxu0 %v603
    %1366 = vmatpush1.msra.mxu0 %v602
    %1367 = vmatprep.subr.mxu0 0.0
    %1368 = vmatpush2.msra.mxu0 0.0
    %1369 = vmatprep.subr.mxu0 0.0
    %1370 = vmatpush2.msra.mxu0 0.0
    %1371 = vmatprep.subr.mxu0 0.0
    %1372 = vmatpush2.msra.mxu0 0.0
    %1373 = vmatprep.subr.mxu0 0.0
    %1374 = vmatpush2.msra.mxu0 0.0
    %1375 = vmatprep.subr.mxu0 0.0
    %1376 = vmatpush2.msra.mxu0 0.0
    %1377 = vmatprep.subr.mxu0 0.0
    %1378 = vmatpush2.msra.mxu0 0.0
    %1379 = vmatprep.subr.mxu0 0.0
    %1380 = vmatpush2.msra.mxu0 0.0
    %1381 = vmatprep.subr.mxu0 0.0
    %1382 = vmatpush2.msra.mxu0 0.0
    %1383 = vmatprep.subr.mxu0 0.0
    %1384 = vmatpush2.msra.mxu0 0.0
    %1385 = vmatprep.subr.mxu0 0.0
    %1386 = vmatpush2.msra.mxu0 0.0
    %1387 = vmatprep.subr.mxu0 0.0
    %1388 = vmatpush2.msra.mxu0 0.0
    %1389 = vmatprep.subr.mxu0 0.0
    %1390 = vmatpush2.msra.mxu0 0.0
    %1391 = vmatprep.subr.mxu0 0.0
    %1392 = vmatpush2.msra.mxu0 0.0
    %1393 = vmatprep.subr.mxu0 0.0
    %1394 = vmatpush2.msra.mxu0 0.0
    %1395 = vmatprep.subr.mxu0 0.0
    %1396 = vmatpush2.msra.mxu0 0.0
    %1397 = vmatprep.subr.mxu0 0.0
    %1398 = vmatpush2.msra.mxu0 0.0
    %1399 = vmatprep.mubr.f32.mxu0 0.0
    %1400 = vmatmul.mubr.f32.gmra.mxu0 %v1330
    %v1401 = vpop.f32.mrf.mxu0
    %v1402 = vadd.f32 %v659, %v1401
    %v1403 = vpop.f32.mrf.mxu0
    %v1404 = vadd.f32 %v663, %v1403
    %1405 = vdwg.mxu0
    %1406 = vmatprep.subr.mxu0 0.0
    %1407 = vmatpush1.msra.mxu0 %v649
    %1408 = vmatprep.subr.mxu0 0.0
    %1409 = vmatpush1.msra.mxu0 %v646
    %1410 = vmatprep.subr.mxu0 0.0
    %1411 = vmatpush1.msra.mxu0 %v643
    %1412 = vmatprep.subr.mxu0 0.0
    %1413 = vmatpush1.msra.mxu0 %v640
    %1414 = vmatprep.subr.mxu0 0.0
    %1415 = vmatpush1.msra.mxu0 %v637
    %1416 = vmatprep.subr.mxu0 0.0
    %1417 = vmatpush1.msra.mxu0 %v634
    %1418 = vmatprep.subr.mxu0 0.0
    %1419 = vmatpush1.msra.mxu0 %v631
    %1420 = vmatprep.subr.mxu0 0.0
    %1421 = vmatpush1.msra.mxu0 %v628
    %1422 = vmatprep.subr.mxu0 0.0
    %1423 = vmatpush1.msra.mxu0 %v625
    %1424 = vmatprep.subr.mxu0 0.0
    %1425 = vmatpush1.msra.mxu0 %v622
    %1426 = vmatprep.subr.mxu0 0.0
    %1427 = vmatpush1.msra.mxu0 %v619
    %1428 = vmatprep.subr.mxu0 0.0
    %1429 = vmatpush1.msra.mxu0 %v616
    %1430 = vmatprep.subr.mxu0 0.0
    %1431 = vmatpush1.msra.mxu0 %v613
    %1432 = vmatprep.subr.mxu0 0.0
    %1433 = vmatpush1.msra.mxu0 %v610
    %1434 = vmatprep.subr.mxu0 0.0
    %1435 = vmatpush1.msra.mxu0 %v607
    %1436 = vmatprep.subr.mxu0 0.0
    %1437 = vmatpush1.msra.mxu0 %v604
    %1438 = vmatprep.subr.mxu0 0.0
    %1439 = vmatpush2.msra.mxu0 0.0
    %1440 = vmatprep.subr.mxu0 0.0
    %1441 = vmatpush2.msra.mxu0 0.0
    %1442 = vmatprep.subr.mxu0 0.0
    %1443 = vmatpush2.msra.mxu0 0.0
    %1444 = vmatprep.subr.mxu0 0.0
    %1445 = vmatpush2.msra.mxu0 0.0
    %1446 = vmatprep.subr.mxu0 0.0
    %1447 = vmatpush2.msra.mxu0 0.0
    %1448 = vmatprep.subr.mxu0 0.0
    %1449 = vmatpush2.msra.mxu0 0.0
    %1450 = vmatprep.subr.mxu0 0.0
    %1451 = vmatpush2.msra.mxu0 0.0
    %1452 = vmatprep.subr.mxu0 0.0
    %1453 = vmatpush2.msra.mxu0 0.0
    %1454 = vmatprep.subr.mxu0 0.0
    %1455 = vmatpush2.msra.mxu0 0.0
    %1456 = vmatprep.subr.mxu0 0.0
    %1457 = vmatpush2.msra.mxu0 0.0
    %1458 = vmatprep.subr.mxu0 0.0
    %1459 = vmatpush2.msra.mxu0 0.0
    %1460 = vmatprep.subr.mxu0 0.0
    %1461 = vmatpush2.msra.mxu0 0.0
    %1462 = vmatprep.subr.mxu0 0.0
    %1463 = vmatpush2.msra.mxu0 0.0
    %1464 = vmatprep.subr.mxu0 0.0
    %1465 = vmatpush2.msra.mxu0 0.0
    %1466 = vmatprep.subr.mxu0 0.0
    %1467 = vmatpush2.msra.mxu0 0.0
    %1468 = vmatprep.subr.mxu0 0.0
    %1469 = vmatpush2.msra.mxu0 0.0
    %1470 = vmatprep.mubr.f32.mxu0 0.0
    %1471 = vmatmul.mubr.f32.gmra.mxu0 %v1330
    %v1472 = vpop.f32.mrf.mxu0
    %v1473 = vadd.f32 %v667, %v1472
    %v1474 = vpop.f32.mrf.mxu0
    %1475 = vdwg.mxu0
    %v1476 = vadd.f32 %v1332, %v1402
    %v1477 = vxor.u32 %v1476, 2147483648
    %v1478 = vmul.f32 %v1477, 1.442695
    %v1479 = vpow.pop %v1478
    %v1480 = vadd.f32 %v1479, 1.0
    %v1481 = vrcp.pop %v1480
    %v1482 = vmul.f32 1.0, %v1481
    %v1483 = vadd.f32 %v1333, %v1404
    %v1484 = vxor.u32 %v1483, 2147483648
    %v1485 = vmul.f32 %v1484, 1.442695
    %v1486 = vpow.pop %v1485
    %v1487 = vadd.f32 %v1486, 1.0
    %v1488 = vrcp.pop %v1487
    %v1489 = vmul.f32 1.0, %v1488
    %v1490 = vmul.f32 %v1482, %v1473
    %v1491 = vadd.f32 %v1334, %v1490
    %v1492 = vtanh.pop %v1491
    %v1493 = vsub.f32 1.0, %v1489
    %v1494 = vmul.f32 %v1493, %v1492
    %v1495 = vmul.f32 %v1489, %v1330
    %v1496 = vadd.f32 %v1494, %v1495
    %1497 = vst [vmem:[#allocation3 + $0x20] sm:$0xff] %v1496
    %v1498 = vld [vmem:[#allocation2 + $0x78] sm:$0xff]
    %v1499 = vld [vmem:[#allocation2 + $0x80] sm:$0xff]
    %v1500 = vld [vmem:[#allocation2 + $0x88] sm:$0xff]
    %1501 = vmatprep.subr.mxu0 %v648
    %1502 = vmatpush1.msra.mxu0 %v647
    %1503 = vmatprep.subr.mxu0 %v645
    %1504 = vmatpush1.msra.mxu0 %v644
    %1505 = vmatprep.subr.mxu0 %v642
    %1506 = vmatpush1.msra.mxu0 %v641
    %1507 = vmatprep.subr.mxu0 %v639
    %1508 = vmatpush1.msra.mxu0 %v638
    %1509 = vmatprep.subr.mxu0 %v636
    %1510 = vmatpush1.msra.mxu0 %v635
    %1511 = vmatprep.subr.mxu0 %v633
    %1512 = vmatpush1.msra.mxu0 %v632
    %1513 = vmatprep.subr.mxu0 %v630
    %1514 = vmatpush1.msra.mxu0 %v629
    %1515 = vmatprep.subr.mxu0 %v627
    %1516 = vmatpush1.msra.mxu0 %v626
    %1517 = vmatprep.subr.mxu0 %v624
    %1518 = vmatpush1.msra.mxu0 %v623
    %1519 = vmatprep.subr.mxu0 %v621
    %1520 = vmatpush1.msra.mxu0 %v620
    %1521 = vmatprep.subr.mxu0 %v618
    %1522 = vmatpush1.msra.mxu0 %v617
    %1523 = vmatprep.subr.mxu0 %v615
    %1524 = vmatpush1.msra.mxu0 %v614
    %1525 = vmatprep.subr.mxu0 %v612
    %1526 = vmatpush1.msra.mxu0 %v611
    %1527 = vmatprep.subr.mxu0 %v609
    %1528 = vmatpush1.msra.mxu0 %v608
    %1529 = vmatprep.subr.mxu0 %v606
    %1530 = vmatpush1.msra.mxu0 %v605
    %1531 = vmatprep.subr.mxu0 %v603
    %1532 = vmatpush1.msra.mxu0 %v602
    %1533 = vmatprep.subr.mxu0 0.0
    %1534 = vmatpush2.msra.mxu0 0.0
    %1535 = vmatprep.subr.mxu0 0.0
    %1536 = vmatpush2.msra.mxu0 0.0
    %1537 = vmatprep.subr.mxu0 0.0
    %1538 = vmatpush2.msra.mxu0 0.0
    %1539 = vmatprep.subr.mxu0 0.0
    %1540 = vmatpush2.msra.mxu0 0.0
    %1541 = vmatprep.subr.mxu0 0.0
    %1542 = vmatpush2.msra.mxu0 0.0
    %1543 = vmatprep.subr.mxu0 0.0
    %1544 = vmatpush2.msra.mxu0 0.0
    %1545 = vmatprep.subr.mxu0 0.0
    %1546 = vmatpush2.msra.mxu0 0.0
    %1547 = vmatprep.subr.mxu0 0.0
    %1548 = vmatpush2.msra.mxu0 0.0
    %1549 = vmatprep.subr.mxu0 0.0
    %1550 = vmatpush2.msra.mxu0 0.0
    %1551 = vmatprep.subr.mxu0 0.0
    %1552 = vmatpush2.msra.mxu0 0.0
    %1553 = vmatprep.subr.mxu0 0.0
    %1554 = vmatpush2.msra.mxu0 0.0
    %1555 = vmatprep.subr.mxu0 0.0
    %1556 = vmatpush2.msra.mxu0 0.0
    %1557 = vmatprep.subr.mxu0 0.0
    %1558 = vmatpush2.msra.mxu0 0.0
    %1559 = vmatprep.subr.mxu0 0.0
    %1560 = vmatpush2.msra.mxu0 0.0
    %1561 = vmatprep.subr.mxu0 0.0
    %1562 = vmatpush2.msra.mxu0 0.0
    %1563 = vmatprep.subr.mxu0 0.0
    %1564 = vmatpush2.msra.mxu0 0.0
    %1565 = vmatprep.mubr.f32.mxu0 0.0
    %1566 = vmatmul.mubr.f32.gmra.mxu0 %v1496
    %v1567 = vpop.f32.mrf.mxu0
    %v1568 = vadd.f32 %v659, %v1567
    %v1569 = vpop.f32.mrf.mxu0
    %v1570 = vadd.f32 %v663, %v1569
    %1571 = vdwg.mxu0
    %1572 = vmatprep.subr.mxu0 0.0
    %1573 = vmatpush1.msra.mxu0 %v649
    %1574 = vmatprep.subr.mxu0 0.0
    %1575 = vmatpush1.msra.mxu0 %v646
    %1576 = vmatprep.subr.mxu0 0.0
    %1577 = vmatpush1.msra.mxu0 %v643
    %1578 = vmatprep.subr.mxu0 0.0
    %1579 = vmatpush1.msra.mxu0 %v640
    %1580 = vmatprep.subr.mxu0 0.0
    %1581 = vmatpush1.msra.mxu0 %v637
    %1582 = vmatprep.subr.mxu0 0.0
    %1583 = vmatpush1.msra.mxu0 %v634
    %1584 = vmatprep.subr.mxu0 0.0
    %1585 = vmatpush1.msra.mxu0 %v631
    %1586 = vmatprep.subr.mxu0 0.0
    %1587 = vmatpush1.msra.mxu0 %v628
    %1588 = vmatprep.subr.mxu0 0.0
    %1589 = vmatpush1.msra.mxu0 %v625
    %1590 = vmatprep.subr.mxu0 0.0
    %1591 = vmatpush1.msra.mxu0 %v622
    %1592 = vmatprep.subr.mxu0 0.0
    %1593 = vmatpush1.msra.mxu0 %v619
    %1594 = vmatprep.subr.mxu0 0.0
    %1595 = vmatpush1.msra.mxu0 %v616
    %1596 = vmatprep.subr.mxu0 0.0
    %1597 = vmatpush1.msra.mxu0 %v613
    %1598 = vmatprep.subr.mxu0 0.0
    %1599 = vmatpush1.msra.mxu0 %v610
    %1600 = vmatprep.subr.mxu0 0.0
    %1601 = vmatpush1.msra.mxu0 %v607
    %1602 = vmatprep.subr.mxu0 0.0
    %1603 = vmatpush1.msra.mxu0 %v604
    %1604 = vmatprep.subr.mxu0 0.0
    %1605 = vmatpush2.msra.mxu0 0.0
    %1606 = vmatprep.subr.mxu0 0.0
    %1607 = vmatpush2.msra.mxu0 0.0
    %1608 = vmatprep.subr.mxu0 0.0
    %1609 = vmatpush2.msra.mxu0 0.0
    %1610 = vmatprep.subr.mxu0 0.0
    %1611 = vmatpush2.msra.mxu0 0.0
    %1612 = vmatprep.subr.mxu0 0.0
    %1613 = vmatpush2.msra.mxu0 0.0
    %1614 = vmatprep.subr.mxu0 0.0
    %1615 = vmatpush2.msra.mxu0 0.0
    %1616 = vmatprep.subr.mxu0 0.0
    %1617 = vmatpush2.msra.mxu0 0.0
    %1618 = vmatprep.subr.mxu0 0.0
    %1619 = vmatpush2.msra.mxu0 0.0
    %1620 = vmatprep.subr.mxu0 0.0
    %1621 = vmatpush2.msra.mxu0 0.0
    %1622 = vmatprep.subr.mxu0 0.0
    %1623 = vmatpush2.msra.mxu0 0.0
    %1624 = vmatprep.subr.mxu0 0.0
    %1625 = vmatpush2.msra.mxu0 0.0
    %1626 = vmatprep.subr.mxu0 0.0
    %1627 = vmatpush2.msra.mxu0 0.0
    %1628 = vmatprep.subr.mxu0 0.0
    %1629 = vmatpush2.msra.mxu0 0.0
    %1630 = vmatprep.subr.mxu0 0.0
    %1631 = vmatpush2.msra.mxu0 0.0
    %1632 = vmatprep.subr.mxu0 0.0
    %1633 = vmatpush2.msra.mxu0 0.0
    %1634 = vmatprep.subr.mxu0 0.0
    %1635 = vmatpush2.msra.mxu0 0.0
    %1636 = vmatprep.mubr.f32.mxu0 0.0
    %1637 = vmatmul.mubr.f32.gmra.mxu0 %v1496
    %v1638 = vpop.f32.mrf.mxu0
    %v1639 = vadd.f32 %v667, %v1638
    %v1640 = vpop.f32.mrf.mxu0
    %1641 = vdwg.mxu0
    %v1642 = vadd.f32 %v1498, %v1568
    %v1643 = vxor.u32 %v1642, 2147483648
    %v1644 = vmul.f32 %v1643, 1.442695
    %v1645 = vpow.pop %v1644
    %v1646 = vadd.f32 %v1645, 1.0
    %v1647 = vrcp.pop %v1646
    %v1648 = vmul.f32 1.0, %v1647
    %v1649 = vadd.f32 %v1499, %v1570
    %v1650 = vxor.u32 %v1649, 2147483648
    %v1651 = vmul.f32 %v1650, 1.442695
    %v1652 = vpow.pop %v1651
    %v1653 = vadd.f32 %v1652, 1.0
    %v1654 = vrcp.pop %v1653
    %v1655 = vmul.f32 1.0, %v1654
    %v1656 = vmul.f32 %v1648, %v1639
    %v1657 = vadd.f32 %v1500, %v1656
    %v1658 = vtanh.pop %v1657
    %v1659 = vsub.f32 1.0, %v1655
    %v1660 = vmul.f32 %v1659, %v1658
    %v1661 = vmul.f32 %v1655, %v1496
    %v1662 = vadd.f32 %v1660, %v1661
    %1663 = vst [vmem:[#allocation3 + $0x28] sm:$0xff] %v1662
    %1664 = vst [vmem:[%s15] sm:$0xff] %v1662
    %v1665 = vld [vmem:[#allocation3] sm:$0xff]
    %v1666 = vld [vmem:[#allocation3 + $0x8] sm:$0xff]
    %v1667 = vld [vmem:[#allocation3 + $0x10] sm:$0xff]
    %v1668 = vld [vmem:[#allocation3 + $0x18] sm:$0xff]
    %v1669 = vld [vmem:[#allocation3 + $0x20] sm:$0xff]
    %v1670 = vld [vmem:[#allocation3 + $0x28] sm:$0xff]
    %v1671 = vld [vmem:[%s10] sm:$0xff]
    %v1672 = vld [vmem:[%s10 + $0x8] sm:$0xff]
    %v1673 = vld [vmem:[%s10 + $0x10] sm:$0xff]
    %v1674 = vld [vmem:[%s10 + $0x18] sm:$0xff]
    %v1675 = vld [vmem:[%s10 + $0x20] sm:$0xff]
    %v1676 = vld [vmem:[%s10 + $0x28] sm:$0xff]
    %v1677 = vld [vmem:[%s10 + $0x30] sm:$0xff]
    %v1678 = vld [vmem:[%s10 + $0x38] sm:$0xff]
    %v1679 = vld [vmem:[%s10 + $0x40] sm:$0xff]
    %v1680 = vld [vmem:[%s10 + $0x48] sm:$0xff]
    %v1681 = vld [vmem:[%s10 + $0x50] sm:$0xff]
    %v1682 = vld [vmem:[%s10 + $0x58] sm:$0xff]
    %v1683 = vld [vmem:[%s10 + $0x60] sm:$0xff]
    %v1684 = vld [vmem:[%s10 + $0x68] sm:$0xff]
    %v1685 = vld [vmem:[%s10 + $0x70] sm:$0xff]
    %v1686 = vld [vmem:[%s10 + $0x78] sm:$0xff]
    %v1687 = vld [vmem:[%s11] sm:$0x1]
    %v1689 = vlaneseq
    %v1690 = vshrl.u32 %v1689, 7
    %v1691 = vsub.s32 0, %v1690
    %v1692 = vrot.slane %v1687, %v1691
    %1694 = vmatprep.subr.mxu0 0.0
    %1695 = vmatpush1.msra.mxu0 %v1686
    %1696 = vmatprep.subr.mxu0 0.0
    %1697 = vmatpush1.msra.mxu0 %v1685
    %1698 = vmatprep.subr.mxu0 0.0
    %1699 = vmatpush1.msra.mxu0 %v1684
    %1700 = vmatprep.subr.mxu0 0.0
    %1701 = vmatpush1.msra.mxu0 %v1683
    %1702 = vmatprep.subr.mxu0 0.0
    %1703 = vmatpush1.msra.mxu0 %v1682
    %1704 = vmatprep.subr.mxu0 0.0
    %1705 = vmatpush1.msra.mxu0 %v1681
    %1706 = vmatprep.subr.mxu0 0.0
    %1707 = vmatpush1.msra.mxu0 %v1680
    %1708 = vmatprep.subr.mxu0 0.0
    %1709 = vmatpush1.msra.mxu0 %v1679
    %1710 = vmatprep.subr.mxu0 0.0
    %1711 = vmatpush1.msra.mxu0 %v1678
    %1712 = vmatprep.subr.mxu0 0.0
    %1713 = vmatpush1.msra.mxu0 %v1677
    %1714 = vmatprep.subr.mxu0 0.0
    %1715 = vmatpush1.msra.mxu0 %v1676
    %1716 = vmatprep.subr.mxu0 0.0
    %1717 = vmatpush1.msra.mxu0 %v1675
    %1718 = vmatprep.subr.mxu0 0.0
    %1719 = vmatpush1.msra.mxu0 %v1674
    %1720 = vmatprep.subr.mxu0 0.0
    %1721 = vmatpush1.msra.mxu0 %v1673
    %1722 = vmatprep.subr.mxu0 0.0
    %1723 = vmatpush1.msra.mxu0 %v1672
    %1724 = vmatprep.subr.mxu0 0.0
    %1725 = vmatpush1.msra.mxu0 %v1671
    %1726 = vmatprep.subr.mxu0 0.0
    %1727 = vmatpush2.msra.mxu0 0.0
    %1728 = vmatprep.subr.mxu0 0.0
    %1729 = vmatpush2.msra.mxu0 0.0
    %1730 = vmatprep.subr.mxu0 0.0
    %1731 = vmatpush2.msra.mxu0 0.0
    %1732 = vmatprep.subr.mxu0 0.0
    %1733 = vmatpush2.msra.mxu0 0.0
    %1734 = vmatprep.subr.mxu0 0.0
    %1735 = vmatpush2.msra.mxu0 0.0
    %1736 = vmatprep.subr.mxu0 0.0
    %1737 = vmatpush2.msra.mxu0 0.0
    %1738 = vmatprep.subr.mxu0 0.0
    %1739 = vmatpush2.msra.mxu0 0.0
    %1740 = vmatprep.subr.mxu0 0.0
    %1741 = vmatpush2.msra.mxu0 0.0
    %1742 = vmatprep.subr.mxu0 0.0
    %1743 = vmatpush2.msra.mxu0 0.0
    %1744 = vmatprep.subr.mxu0 0.0
    %1745 = vmatpush2.msra.mxu0 0.0
    %1746 = vmatprep.subr.mxu0 0.0
    %1747 = vmatpush2.msra.mxu0 0.0
    %1748 = vmatprep.subr.mxu0 0.0
    %1749 = vmatpush2.msra.mxu0 0.0
    %1750 = vmatprep.subr.mxu0 0.0
    %1751 = vmatpush2.msra.mxu0 0.0
    %1752 = vmatprep.subr.mxu0 0.0
    %1753 = vmatpush2.msra.mxu0 0.0
    %1754 = vmatprep.subr.mxu0 0.0
    %1755 = vmatpush2.msra.mxu0 0.0
    %1756 = vmatprep.subr.mxu0 0.0
    %1757 = vmatpush2.msra.mxu0 0.0
    %1758 = vmatprep.mubr.f32.mxu0 0.0
    %1759 = vmatmul.mubr.f32.gmra.mxu0 %v1665
    %v1760 = vpop.f32.mrf.mxu0
    %v1761 = vadd.f32 %v1692, %v1760
    %v1762 = vpop.f32.mrf.mxu0
    %1763 = vmatprep.mubr.f32.mxu0 0.0
    %1764 = vmatmul.mubr.f32.gmra.mxu0 %v1666
    %v1765 = vpop.f32.mrf.mxu0
    %v1766 = vadd.f32 %v1692, %v1765
    %v1767 = vpop.f32.mrf.mxu0
    %1768 = vmatprep.mubr.f32.mxu0 0.0
    %1769 = vmatmul.mubr.f32.gmra.mxu0 %v1667
    %v1770 = vpop.f32.mrf.mxu0
    %v1771 = vadd.f32 %v1692, %v1770
    %v1772 = vpop.f32.mrf.mxu0
    %1773 = vmatprep.mubr.f32.mxu0 0.0
    %1774 = vmatmul.mubr.f32.gmra.mxu0 %v1668
    %v1775 = vpop.f32.mrf.mxu0
    %v1776 = vadd.f32 %v1692, %v1775
    %v1777 = vpop.f32.mrf.mxu0
    %1778 = vmatprep.mubr.f32.mxu0 0.0
    %1779 = vmatmul.mubr.f32.gmra.mxu0 %v1669
    %v1780 = vpop.f32.mrf.mxu0
    %v1781 = vadd.f32 %v1692, %v1780
    %v1782 = vpop.f32.mrf.mxu0
    %1783 = vmatprep.mubr.f32.mxu0 0.0
    %1784 = vmatmul.mubr.f32.gmra.mxu0 %v1670
    %v1785 = vpop.f32.mrf.mxu0
    %v1786 = vadd.f32 %v1692, %v1785
    %v1787 = vpop.f32.mrf.mxu0
    %1788 = vdwg.mxu0
    %vm1789 = vcmp.gt.f32.partialorder %v1761, 0.0
    %vm1790 = vcmp.gt.f32.partialorder %v1766, 0.0
    %vm1791 = vcmp.gt.f32.partialorder %v1771, 0.0
    %vm1792 = vcmp.gt.f32.partialorder %v1776, 0.0
    %vm1793 = vcmp.gt.f32.partialorder %v1781, 0.0
    %vm1794 = vcmp.gt.f32.partialorder %v1786, 0.0
    %v1795 = vmul.f32 %v1761, 0.01
    %v1796 = vmul.f32 %v1766, 0.01
    %v1797 = vmul.f32 %v1771, 0.01
    %v1798 = vmul.f32 %v1776, 0.01
    %v1799 = vmul.f32 %v1781, 0.01
    %v1800 = vmul.f32 %v1786, 0.01
    %v1801 = vsel %vm1789, %v1761, %v1795
    %v1802 = vsel %vm1790, %v1766, %v1796
    %v1803 = vsel %vm1791, %v1771, %v1797
    %v1804 = vsel %vm1792, %v1776, %v1798
    %v1805 = vsel %vm1793, %v1781, %v1799
    %v1806 = vsel %vm1794, %v1786, %v1800
    %v1807 = vld [vmem:[%s12] sm:$0xff]
    %v1808 = vld [vmem:[%s12 + $0x8] sm:$0xff]
    %v1809 = vld [vmem:[%s12 + $0x10] sm:$0xff]
    %v1810 = vld [vmem:[%s12 + $0x18] sm:$0xff]
    %v1811 = vld [vmem:[%s13] sm:$0x1]
    %v1813 = vlaneseq
    %v1814 = vshrl.u32 %v1813, 7
    %v1815 = vsub.s32 0, %v1814
    %v1816 = vrot.slane %v1811, %v1815
    %v1819 = vsel %vm209, %v1801, 0
    %v1822 = vsel %vm209, %v1802, 0
    %v1825 = vsel %vm209, %v1803, 0
    %v1828 = vsel %vm209, %v1804, 0
    %v1831 = vsel %vm209, %v1805, 0
    %v1834 = vsel %vm209, %v1806, 0
    %1836 = vmatprep.subr.mxu0 0.0
    %1837 = vmatpush1.msra.mxu0 0.0
    %1838 = vmatprep.subr.mxu0 0.0
    %1839 = vmatpush1.msra.mxu0 0.0
    %1840 = vmatprep.subr.mxu0 0.0
    %1841 = vmatpush1.msra.mxu0 0.0
    %1842 = vmatprep.subr.mxu0 0.0
    %1843 = vmatpush1.msra.mxu0 0.0
    %1844 = vmatprep.subr.mxu0 0.0
    %1845 = vmatpush1.msra.mxu0 0.0
    %1846 = vmatprep.subr.mxu0 0.0
    %1847 = vmatpush1.msra.mxu0 0.0
    %1848 = vmatprep.subr.mxu0 0.0
    %1849 = vmatpush1.msra.mxu0 0.0
    %1850 = vmatprep.subr.mxu0 0.0
    %1851 = vmatpush1.msra.mxu0 0.0
    %1852 = vmatprep.subr.mxu0 0.0
    %1853 = vmatpush1.msra.mxu0 0.0
    %1854 = vmatprep.subr.mxu0 0.0
    %1855 = vmatpush1.msra.mxu0 0.0
    %1856 = vmatprep.subr.mxu0 0.0
    %1857 = vmatpush1.msra.mxu0 0.0
    %1858 = vmatprep.subr.mxu0 0.0
    %1859 = vmatpush1.msra.mxu0 0.0
    %1860 = vmatprep.subr.mxu0 0.0
    %1861 = vmatpush1.msra.mxu0 %v1810
    %1862 = vmatprep.subr.mxu0 0.0
    %1863 = vmatpush1.msra.mxu0 %v1809
    %1864 = vmatprep.subr.mxu0 0.0
    %1865 = vmatpush1.msra.mxu0 %v1808
    %1866 = vmatprep.subr.mxu0 0.0
    %1867 = vmatpush1.msra.mxu0 %v1807
    %1868 = vmatprep.subr.mxu0 0.0
    %1869 = vmatpush2.msra.mxu0 0.0
    %1870 = vmatprep.subr.mxu0 0.0
    %1871 = vmatpush2.msra.mxu0 0.0
    %1872 = vmatprep.subr.mxu0 0.0
    %1873 = vmatpush2.msra.mxu0 0.0
    %1874 = vmatprep.subr.mxu0 0.0
    %1875 = vmatpush2.msra.mxu0 0.0
    %1876 = vmatprep.subr.mxu0 0.0
    %1877 = vmatpush2.msra.mxu0 0.0
    %1878 = vmatprep.subr.mxu0 0.0
    %1879 = vmatpush2.msra.mxu0 0.0
    %1880 = vmatprep.subr.mxu0 0.0
    %1881 = vmatpush2.msra.mxu0 0.0
    %1882 = vmatprep.subr.mxu0 0.0
    %1883 = vmatpush2.msra.mxu0 0.0
    %1884 = vmatprep.subr.mxu0 0.0
    %1885 = vmatpush2.msra.mxu0 0.0
    %1886 = vmatprep.subr.mxu0 0.0
    %1887 = vmatpush2.msra.mxu0 0.0
    %1888 = vmatprep.subr.mxu0 0.0
    %1889 = vmatpush2.msra.mxu0 0.0
    %1890 = vmatprep.subr.mxu0 0.0
    %1891 = vmatpush2.msra.mxu0 0.0
    %1892 = vmatprep.subr.mxu0 0.0
    %1893 = vmatpush2.msra.mxu0 0.0
    %1894 = vmatprep.subr.mxu0 0.0
    %1895 = vmatpush2.msra.mxu0 0.0
    %1896 = vmatprep.subr.mxu0 0.0
    %1897 = vmatpush2.msra.mxu0 0.0
    %1898 = vmatprep.subr.mxu0 0.0
    %1899 = vmatpush2.msra.mxu0 0.0
    %1900 = vmatprep.mubr.f32.mxu0 0.0
    %1901 = vmatmul.mubr.f32.gmra.mxu0 %v1819
    %v1902 = vpop.f32.mrf.mxu0
    %v1903 = vadd.f32 %v1816, %v1902
    %v1904 = vpop.f32.mrf.mxu0
    %1905 = vmatprep.mubr.f32.mxu0 0.0
    %1906 = vmatmul.mubr.f32.gmra.mxu0 %v1822
    %v1907 = vpop.f32.mrf.mxu0
    %v1908 = vadd.f32 %v1816, %v1907
    %v1909 = vpop.f32.mrf.mxu0
    %1910 = vmatprep.mubr.f32.mxu0 0.0
    %1911 = vmatmul.mubr.f32.gmra.mxu0 %v1825
    %v1912 = vpop.f32.mrf.mxu0
    %v1913 = vadd.f32 %v1816, %v1912
    %v1914 = vpop.f32.mrf.mxu0
    %1915 = vmatprep.mubr.f32.mxu0 0.0
    %1916 = vmatmul.mubr.f32.gmra.mxu0 %v1828
    %v1917 = vpop.f32.mrf.mxu0
    %v1918 = vadd.f32 %v1816, %v1917
    %v1919 = vpop.f32.mrf.mxu0
    %1920 = vmatprep.mubr.f32.mxu0 0.0
    %1921 = vmatmul.mubr.f32.gmra.mxu0 %v1831
    %v1922 = vpop.f32.mrf.mxu0
    %v1923 = vadd.f32 %v1816, %v1922
    %v1924 = vpop.f32.mrf.mxu0
    %1925 = vmatprep.mubr.f32.mxu0 0.0
    %1926 = vmatmul.mubr.f32.gmra.mxu0 %v1834
    %v1927 = vpop.f32.mrf.mxu0
    %v1928 = vadd.f32 %v1816, %v1927
    %v1929 = vpop.f32.mrf.mxu0
    %1930 = vdwg.mxu0
    %vm1931 = vcmask 80896
    %1932 = vst.msk [vmem:[#allocation4] sm:$0xff] %vm1931, %v1903
    %1933 = vst.msk [vmem:[#allocation4 + $0x8] sm:$0xff] %vm1931, %v1908
    %1934 = vst.msk [vmem:[#allocation4 + $0x10] sm:$0xff] %vm1931, %v1913
    %1935 = vst.msk [vmem:[#allocation4 + $0x18] sm:$0xff] %vm1931, %v1918
    %1936 = vst.msk [vmem:[#allocation4 + $0x20] sm:$0xff] %vm1931, %v1923
    %1937 = vst.msk [vmem:[#allocation4 + $0x28] sm:$0xff] %vm1931, %v1928
    // Predicated region
    $region58: #{cen_ddrqn_forward.1} parent=1 // pred_check
      _
    $region59: #{cen_ddrqn_forward.1} parent=1 // pred_check_branch
      %1939 = sbr.rel (0) target = $region61
    $region60: #{cen_ddrqn_forward.1} parent=1 // pred_region
      %s1941 = ssub.s32 768, 768
      %1942 = vsyncadd [#allocation5], %s1941
      %s1943 = sshll.u32 [#allocation4], 4
      %s1944 = int_to_ptr.vmem [resolvable:$true] %s1943
      %1949 = dma.vmem_to_hbm [thread:$0]  %s1944, 768, %s14, [#allocation5], 128, 128, 8
    $region61: #{cen_ddrqn_forward.1} parent=1 // pred_fallthru
      _
    // Predicated region
    $region62: #{cen_ddrqn_forward.1} parent=1 // pred_check
      _
    $region63: #{cen_ddrqn_forward.1} parent=1 // pred_check_branch
      %1951 = sbr.rel (0) target = $region65
    $region64: #{cen_ddrqn_forward.1} parent=1 // pred_region
      _
    $region65: #{cen_ddrqn_forward.1} parent=1 // pred_fallthru
      _
    // Predicated region
    $region66: #{cen_ddrqn_forward.1} parent=1 // pred_check
      _
    $region67: #{cen_ddrqn_forward.1} parent=1 // pred_check_branch
      %1953 = sbr.rel (0) target = $region69
    $region68: #{cen_ddrqn_forward.1} parent=1 // pred_region
      %1954 = dma.done [#allocation5], 768
    $region69: #{cen_ddrqn_forward.1} parent=1 // pred_fallthru
      _
    // Predicated region
    $region70: #{cen_ddrqn_forward.1} parent=1 // pred_check
      _
    $region71: #{cen_ddrqn_forward.1} parent=1 // pred_check_branch
      %1956 = sbr.rel (0) target = $region73
    $region72: #{cen_ddrqn_forward.1} parent=1 // pred_region
      _
    $region73: #{cen_ddrqn_forward.1} parent=1 // pred_fallthru
      _
    %1957 = vsyncpa [#allocation5], 1

</llo_original>
